<compile_context>
chip_gen: v7x
topology: tpu7x:2x2x1
jax: 0.10.0
libtpu: 0.0.40
codegen_flags: <defaults>
</compile_context>

<pallas_src>
import functools

import jax
import jax.numpy as jnp
import numpy as np
from jax.experimental import pallas as pl
from jax.experimental.pallas import tpu as pltpu


# ----------------------------------------------------------------------------
# Trace-time constant builders (numpy -> baked-in tiny constants).
# ----------------------------------------------------------------------------
def _tap_offsets_and_masks(h, w, bb):
    """Lane offsets + validity masks for the 9 taps of a 3x3 SAME conv.

    Activations are (C, bb*H*W) with positions on the lane axis; tap (kh,kw)
    is a lane roll by (kh-1)*W + (kw-1) plus a mask that zeroes positions
    whose source pixel would fall outside the image (zero padding)."""
    hw = h * w
    p = np.arange(hw)
    hh, ww = p // w, p % w
    offs = []
    masks = np.zeros((9, hw), np.float32)
    for t in range(9):
        dh, dw = t // 3 - 1, t % 3 - 1
        offs.append(dh * w + dw)
        valid = (hh + dh >= 0) & (hh + dh < h) & (ww + dw >= 0) & (ww + dw < w)
        masks[t] = valid
    return tuple(offs), jnp.asarray(np.tile(masks, (1, bb)))


def _pool_select_matrix(h, w, bb):
    """0/1 matrix gathering the (even h, even w) lanes of a 2x2/2 maxpool:
    shape (bb*H*W, bb*(H/2)*(W/2)), block-diagonal over the bb images."""
    hw, h2, w2 = h * w, h // 2, w // 2
    pp = h2 * w2
    sel = np.zeros((bb * hw, bb * pp), np.float32)
    for b in range(bb):
        for i in range(h2):
            for j in range(w2):
                sel[b * hw + (2 * i) * w + (2 * j), b * pp + i * w2 + j] = 1.0
    return jnp.asarray(sel)


def _pick_batch_block(n, hw_out):
    """Largest divisor of n (<= 8) that keeps the output block lane-dense."""
    for bb in range(min(8, n), 0, -1):
        if n % bb == 0 and (bb * hw_out) % 128 == 0:
            return bb
    return n  # whole batch in one step -> block == array, always legal


# ----------------------------------------------------------------------------
# Fused forward kernel: conv1+bias [+ReLU] [+conv2+bias] [+ReLU] [+maxpool 2x2]
# ----------------------------------------------------------------------------
def _deep_cnn_kernel(*refs, num_layers, taps, w_img):
    it = iter(refs)
    x_ref = next(it)          # (Cin_p, L)   activations, positions on lanes
    mask_ref = next(it)       # (9, L)       resident tap validity masks
    w1_ref = next(it)         # (C1, 9*Cin_p) resident im2col weights
    b1_ref = next(it)         # (C1, 1)
    w2_ref = b2_ref = sel_ref = None
    if num_layers >= 3:
        w2_ref = next(it)     # (C2, 9*C1)
        b2_ref = next(it)     # (C2, 1)
    if num_layers >= 5:
        sel_ref = next(it)    # (L, bb*HW/4) resident pool selection matrix
    o_ref = next(it)          # (Cout, bb*HW_out)
    slab_ref = next(it)       # (9*max(Cin_p, C1), L) f32 scratch (fully overwritten)

    L = x_ref.shape[-1]

    def conv3x3(act, w_ref, b_ref):
        # 3x3 SAME conv as one im2col matmul: build the (9*Cin, L) slab with
        # 9 lane rolls (+ masks for the image border), then one MXU matmul.
        c = act.shape[0]
        for t, off in enumerate(taps):
            sh = act if off == 0 else pltpu.roll(act, shift=(-off) % L, axis=1)
            if off != 0:
                sh = sh * mask_ref[t:t + 1, :]
            slab_ref[t * c:(t + 1) * c, :] = sh          # aligned 8-row stores
        k = 9 * c
        return (jnp.dot(w_ref[...], slab_ref[0:k, :],
                        preferred_element_type=jnp.float32) + b_ref[...])

    y = conv3x3(x_ref[...].astype(jnp.float32), w1_ref, b1_ref)   # layer 1: conv1
    if num_layers >= 2:                                           # layer 2: ReLU
        y = jnp.maximum(y, 0.0)
    if num_layers >= 3:                                           # layer 3: conv2
        y = conv3x3(y, w2_ref, b2_ref)
    if num_layers >= 4:                                           # layer 4: ReLU
        y = jnp.maximum(y, 0.0)
    if num_layers >= 5:                                           # layer 5: maxpool 2x2/2
        # Neighbour maxes via lane rolls (XLU), then gather the even (h, w)
        # positions with one constant 0/1 selection matmul (lane-dense output).
        hmax = jnp.maximum(y, pltpu.roll(y, shift=L - 1, axis=1))            # y[p], y[p+1]
        vmax = jnp.maximum(hmax, pltpu.roll(hmax, shift=L - w_img, axis=1))  # + row below
        y = jnp.dot(vmax, sel_ref[...], preferred_element_type=jnp.float32)
    o_ref[...] = y.astype(o_ref.dtype)


def _deep_cnn_forward(x_nchw, w1_flat, b1_col, w2_flat, b2_col, *, num_layers):
    n, cin, h, w = x_nchw.shape
    c1 = w1_flat.shape[0]
    c2 = w2_flat.shape[0]
    cin_p = w1_flat.shape[1] // 9
    assert c1 % 8 == 0 and c2 % 8 == 0  # TODO(synk): generic Cout padding if needed
    pool = num_layers >= 5
    if pool:
        assert h % 2 == 0 and w % 2 == 0

    hw = h * w
    out_c = c1 if num_layers < 3 else c2
    hw_out = (h // 2) * (w // 2) if pool else hw
    bb = _pick_batch_block(n, hw_out)
    grid = (n // bb,)
    L = bb * hw

    # Channels-off-lanes layout: (C, N*H*W), image positions on the lane axis.
    x = x_nchw
    if cin < cin_p:
        x = jnp.pad(x, ((0, 0), (0, cin_p - cin), (0, 0), (0, 0)))
    x2d = jnp.transpose(x, (1, 0, 2, 3)).reshape(cin_p, n * hw)

    taps, masks = _tap_offsets_and_masks(h, w, bb)

    in_specs = [
        pl.BlockSpec((cin_p, L), lambda i: (0, i)),          # bb images per step
        pl.BlockSpec((9, L), lambda i: (0, 0)),              # resident tap masks
        pl.BlockSpec((c1, 9 * cin_p), lambda i: (0, 0)),     # resident conv1 weights
        pl.BlockSpec((c1, 1), lambda i: (0, 0)),
    ]
    operands = [x2d, masks, w1_flat, b1_col]
    if num_layers >= 3:
        in_specs += [pl.BlockSpec((c2, 9 * c1), lambda i: (0, 0)),
                     pl.BlockSpec((c2, 1), lambda i: (0, 0))]
        operands += [w2_flat, b2_col]
    if pool:
        in_specs += [pl.BlockSpec((L, bb * hw_out), lambda i: (0, 0))]
        operands += [_pool_select_matrix(h, w, bb)]

    kernel = functools.partial(_deep_cnn_kernel, num_layers=num_layers,
                               taps=taps, w_img=w)
    out2d = pl.pallas_call(
        kernel,
        out_shape=jax.ShapeDtypeStruct((out_c, n * hw_out), x_nchw.dtype),
        grid=grid,
        in_specs=in_specs,
        out_specs=pl.BlockSpec((out_c, bb * hw_out), lambda i: (0, i)),
        scratch_shapes=[pltpu.VMEM((9 * max(cin_p, c1), L), jnp.float32)],
        compiler_params=pltpu.CompilerParams(
            dimension_semantics=("parallel",)),   # batch blocks -> both TCs on v7x
    )(*operands)

    h_out, w_out = ((h // 2, w // 2) if pool else (h, w))
    y = out2d.reshape(out_c, n, hw_out)
    y = jnp.transpose(y, (1, 0, 2)).reshape(n, out_c, h_out, w_out)  # back to NCHW
    return y


# ----------------------------------------------------------------------------
# Deep_CNN equivalent
# ----------------------------------------------------------------------------
def init_params(key):
    k1, k2, k3, k4 = jax.random.split(key, 4)
    w1 = jax.random.normal(k1, (8, 4, 3, 3), jnp.float32) / jnp.sqrt(4.0 * 9.0)
    b1 = 0.1 * jax.random.normal(k2, (8,), jnp.float32)
    w2 = jax.random.normal(k3, (16, 8, 3, 3), jnp.float32) / jnp.sqrt(8.0 * 9.0)
    b2 = 0.1 * jax.random.normal(k4, (16,), jnp.float32)
    return (w1, b1, w2, b2)


class DeepCNNPallas:
    """Mirrors Deep_CNN: keeps a layer list, runs layers[:layer_number] — fused."""

    LAYER_NAMES = ("conv1", "relu1", "conv2", "relu2", "maxpool")

    def __init__(self, params, layer_number=None):
        w1, b1, w2, b2 = params
        c1, cin = w1.shape[0], w1.shape[1]
        c2 = w2.shape[0]
        cin_p = ((cin + 7) // 8) * 8   # pad conv1 input channels to a sublane multiple

        def prep(wt, cpad):
            # PyTorch OIHW -> (Cout, 9*Cin_pad) im2col slab, column = tap*Cin_pad + ci.
            co, ci = wt.shape[0], wt.shape[1]
            wt = jnp.transpose(wt, (0, 2, 3, 1))              # (O, 3, 3, I)
            if ci < cpad:
                wt = jnp.pad(wt, ((0, 0), (0, 0), (0, 0), (0, cpad - ci)))
            return wt.reshape(co, 9 * cpad)

        self.w1_flat = prep(w1, cin_p)
        self.w2_flat = prep(w2, c1)
        self.b1_col = b1.reshape(c1, 1)
        self.b2_col = b2.reshape(c2, 1)

        self.model_layer_list = list(self.LAYER_NAMES)
        self.NUMBER_OF_LAYERS = len(self.model_layer_list)
        # Same slicing semantics as nn.Sequential(*children[:layer_number]).
        self.num_layers = len(self.model_layer_list[:layer_number])

        if self.num_layers == 0:
            self._forward = None
        else:
            self._forward = jax.jit(functools.partial(
                _deep_cnn_forward, num_layers=self.num_layers))

    def __call__(self, x_nchw):
        if self.num_layers == 0:
            return x_nchw
        return self._forward(x_nchw, self.w1_flat, self.b1_col,
                             self.w2_flat, self.b2_col)


# ----------------------------------------------------------------------------
# Pure-JAX reference of the same torch model (for correctness check)
# ----------------------------------------------------------------------------
def torch_like_reference(x, params, num_layers=5):
    w1, b1, w2, b2 = params

    def conv(t, wgt, bias):
        y = jax.lax.conv_general_dilated(
            t, wgt, (1, 1), "SAME", dimension_numbers=("NCHW", "OIHW", "NCHW"))
        return y + bias[None, :, None, None]

    layers = [
        lambda t: conv(t, w1, b1),
        lambda t: jnp.maximum(t, 0.0),
        lambda t: conv(t, w2, b2),
        lambda t: jnp.maximum(t, 0.0),
        lambda t: jax.lax.reduce_window(t, -jnp.inf, jax.lax.max,
                                        (1, 1, 2, 2), (1, 1, 2, 2), "VALID"),
    ]
    for fn in layers[:num_layers]:
        x = fn(x)
    return x


if __name__ == "__main__":
    key = jax.random.PRNGKey(0)
    pkey, xkey = jax.random.split(key)
    params = init_params(pkey)
    x = jax.random.normal(xkey, (2, 4, 16, 16), jnp.float32)     # NCHW, like PyTorch

    # Full model (layer_number=None keeps all 5 layers).
    model = DeepCNNPallas(params, layer_number=None)
    out = jax.block_until_ready(model(x))
    ref = torch_like_reference(x, params, num_layers=5)
    assert out.shape == (2, 16, 8, 8), out.shape
    err = float(jnp.max(jnp.abs(out - ref)))
    assert jnp.allclose(out, ref, atol=1e-4, rtol=1e-4), err

    # Truncated model (Deep_CNN(..., layer_number=2) -> conv1 + ReLU only).
    model2 = DeepCNNPallas(params, layer_number=2)
    out2 = jax.block_until_ready(model2(x))
    ref2 = torch_like_reference(x, params, num_layers=2)
    assert out2.shape == (2, 8, 16, 16), out2.shape
    err2 = float(jnp.max(jnp.abs(out2 - ref2)))
    assert jnp.allclose(out2, ref2, atol=1e-4, rtol=1e-4), err2

    print("KERNEL_OK")
</pallas_src>

<mosaic_0001>
module attributes {stable_mosaic.version = 11 : i64} {
  func.func @_deep_cnn_kernel(%arg0: i32, %arg1: memref<8x512xf32, #tpu.memory_space<vmem>>, %arg2: memref<9x512xf32, #tpu.memory_space<vmem>>, %arg3: memref<8x72xf32, #tpu.memory_space<vmem>>, %arg4: memref<8x1xf32, #tpu.memory_space<vmem>>, %arg5: memref<16x72xf32, #tpu.memory_space<vmem>>, %arg6: memref<16x1xf32, #tpu.memory_space<vmem>>, %arg7: memref<512x128xf32, #tpu.memory_space<vmem>>, %arg8: memref<16x128xf32, #tpu.memory_space<vmem>>, %arg9: memref<72x512xf32, #tpu.memory_space<vmem>>) attributes {dimension_semantics = [#tpu.dimension_semantics<parallel>], iteration_bounds = array<i64: 1>, scalar_prefetch = 0 : i64, scratch_operands = 1 : i64, tpu.core_type = #tpu.core_type<tc>, window_params = [{transform_indices = @transform_0, window_bounds = array<i64: 8, 512>}, {pipeline_mode = #tpu.pipeline_mode<synchronous>, transform_indices = @transform_1, window_bounds = array<i64: 9, 512>}, {pipeline_mode = #tpu.pipeline_mode<synchronous>, transform_indices = @transform_2, window_bounds = array<i64: 8, 72>}, {pipeline_mode = #tpu.pipeline_mode<synchronous>, transform_indices = @transform_3, window_bounds = array<i64: 8, 1>}, {pipeline_mode = #tpu.pipeline_mode<synchronous>, transform_indices = @transform_4, window_bounds = array<i64: 16, 72>}, {pipeline_mode = #tpu.pipeline_mode<synchronous>, transform_indices = @transform_5, window_bounds = array<i64: 16, 1>}, {pipeline_mode = #tpu.pipeline_mode<synchronous>, transform_indices = @transform_6, window_bounds = array<i64: 512, 128>}, {transform_indices = @transform_7, window_bounds = array<i64: 16, 128>}]} {
    %c0 = arith.constant 0 : index
    %c0_0 = arith.constant 0 : index
    %0 = vector.load %arg1[%c0, %c0_0] : memref<8x512xf32, #tpu.memory_space<vmem>>, vector<8x512xf32>
    %c17_i32 = arith.constant 17 : i32
    %1 = tpu.dynamic_rotate %0 by %c17_i32 dim 1 : vector<8x512xf32>, i32 -> vector<8x512xf32>
    %c0_1 = arith.constant 0 : index
    %c0_2 = arith.constant 0 : index
    %2 = vector.load %arg2[%c0_1, %c0_2] : memref<9x512xf32, #tpu.memory_space<vmem>>, vector<1x512xf32>
    %3 = vector.broadcast %2 : vector<1x512xf32> to vector<8x512xf32>
    %4 = arith.mulf %1, %3 : vector<8x512xf32>
    %c0_3 = arith.constant 0 : index
    %c0_4 = arith.constant 0 : index
    %5 = vector.load %arg9[%c0_3, %c0_4] : memref<72x512xf32, #tpu.memory_space<vmem>>, vector<8x512xf32>
    tpu.vector_store %arg9[%c0_3, %c0_4], %4 {strides = array<i32>} : memref<72x512xf32, #tpu.memory_space<vmem>>, vector<8x512xf32>,
    %c16_i32 = arith.constant 16 : i32
    %6 = tpu.dynamic_rotate %0 by %c16_i32 dim 1 : vector<8x512xf32>, i32 -> vector<8x512xf32>
    %c1 = arith.constant 1 : index
    %c0_5 = arith.constant 0 : index
    %7 = vector.load %arg2[%c1, %c0_5] : memref<9x512xf32, #tpu.memory_space<vmem>>, vector<1x512xf32>
    %8 = vector.broadcast %7 : vector<1x512xf32> to vector<8x512xf32>
    %9 = arith.mulf %6, %8 : vector<8x512xf32>
    %c8 = arith.constant 8 : index
    %c0_6 = arith.constant 0 : index
    %10 = vector.load %arg9[%c8, %c0_6] : memref<72x512xf32, #tpu.memory_space<vmem>>, vector<8x512xf32>
    tpu.vector_store %arg9[%c8, %c0_6], %9 {strides = array<i32>} : memref<72x512xf32, #tpu.memory_space<vmem>>, vector<8x512xf32>,
    %c15_i32 = arith.constant 15 : i32
    %11 = tpu.dynamic_rotate %0 by %c15_i32 dim 1 : vector<8x512xf32>, i32 -> vector<8x512xf32>
    %c2 = arith.constant 2 : index
    %c0_7 = arith.constant 0 : index
    %12 = vector.load %arg2[%c2, %c0_7] : memref<9x512xf32, #tpu.memory_space<vmem>>, vector<1x512xf32>
    %13 = vector.broadcast %12 : vector<1x512xf32> to vector<8x512xf32>
    %14 = arith.mulf %11, %13 : vector<8x512xf32>
    %c16 = arith.constant 16 : index
    %c0_8 = arith.constant 0 : index
    %15 = vector.load %arg9[%c16, %c0_8] : memref<72x512xf32, #tpu.memory_space<vmem>>, vector<8x512xf32>
    tpu.vector_store %arg9[%c16, %c0_8], %14 {strides = array<i32>} : memref<72x512xf32, #tpu.memory_space<vmem>>, vector<8x512xf32>,
    %c1_i32 = arith.constant 1 : i32
    %16 = tpu.dynamic_rotate %0 by %c1_i32 dim 1 : vector<8x512xf32>, i32 -> vector<8x512xf32>
    %c3 = arith.constant 3 : index
    %c0_9 = arith.constant 0 : index
    %17 = vector.load %arg2[%c3, %c0_9] : memref<9x512xf32, #tpu.memory_space<vmem>>, vector<1x512xf32>
    %18 = vector.broadcast %17 : vector<1x512xf32> to vector<8x512xf32>
    %19 = arith.mulf %16, %18 : vector<8x512xf32>
    %c24 = arith.constant 24 : index
    %c0_10 = arith.constant 0 : index
    %20 = vector.load %arg9[%c24, %c0_10] : memref<72x512xf32, #tpu.memory_space<vmem>>, vector<8x512xf32>
    tpu.vector_store %arg9[%c24, %c0_10], %19 {strides = array<i32>} : memref<72x512xf32, #tpu.memory_space<vmem>>, vector<8x512xf32>,
    %c32 = arith.constant 32 : index
    %c0_11 = arith.constant 0 : index
    %21 = vector.load %arg9[%c32, %c0_11] : memref<72x512xf32, #tpu.memory_space<vmem>>, vector<8x512xf32>
    tpu.vector_store %arg9[%c32, %c0_11], %0 {strides = array<i32>} : memref<72x512xf32, #tpu.memory_space<vmem>>, vector<8x512xf32>,
    %c511_i32 = arith.constant 511 : i32
    %22 = tpu.dynamic_rotate %0 by %c511_i32 dim 1 : vector<8x512xf32>, i32 -> vector<8x512xf32>
    %c5 = arith.constant 5 : index
    %c0_12 = arith.constant 0 : index
    %23 = vector.load %arg2[%c5, %c0_12] : memref<9x512xf32, #tpu.memory_space<vmem>>, vector<1x512xf32>
    %24 = vector.broadcast %23 : vector<1x512xf32> to vector<8x512xf32>
    %25 = arith.mulf %22, %24 : vector<8x512xf32>
    %c40 = arith.constant 40 : index
    %c0_13 = arith.constant 0 : index
    %26 = vector.load %arg9[%c40, %c0_13] : memref<72x512xf32, #tpu.memory_space<vmem>>, vector<8x512xf32>
    tpu.vector_store %arg9[%c40, %c0_13], %25 {strides = array<i32>} : memref<72x512xf32, #tpu.memory_space<vmem>>, vector<8x512xf32>,
    %c497_i32 = arith.constant 497 : i32
    %27 = tpu.dynamic_rotate %0 by %c497_i32 dim 1 : vector<8x512xf32>, i32 -> vector<8x512xf32>
    %c6 = arith.constant 6 : index
    %c0_14 = arith.constant 0 : index
    %28 = vector.load %arg2[%c6, %c0_14] : memref<9x512xf32, #tpu.memory_space<vmem>>, vector<1x512xf32>
    %29 = vector.broadcast %28 : vector<1x512xf32> to vector<8x512xf32>
    %30 = arith.mulf %27, %29 : vector<8x512xf32>
    %c48 = arith.constant 48 : index
    %c0_15 = arith.constant 0 : index
    %31 = vector.load %arg9[%c48, %c0_15] : memref<72x512xf32, #tpu.memory_space<vmem>>, vector<8x512xf32>
    tpu.vector_store %arg9[%c48, %c0_15], %30 {strides = array<i32>} : memref<72x512xf32, #tpu.memory_space<vmem>>, vector<8x512xf32>,
    %c496_i32 = arith.constant 496 : i32
    %32 = tpu.dynamic_rotate %0 by %c496_i32 dim 1 : vector<8x512xf32>, i32 -> vector<8x512xf32>
    %c7 = arith.constant 7 : index
    %c0_16 = arith.constant 0 : index
    %33 = vector.load %arg2[%c7, %c0_16] : memref<9x512xf32, #tpu.memory_space<vmem>>, vector<1x512xf32>
    %34 = vector.broadcast %33 : vector<1x512xf32> to vector<8x512xf32>
    %35 = arith.mulf %32, %34 : vector<8x512xf32>
    %c56 = arith.constant 56 : index
    %c0_17 = arith.constant 0 : index
    %36 = vector.load %arg9[%c56, %c0_17] : memref<72x512xf32, #tpu.memory_space<vmem>>, vector<8x512xf32>
    tpu.vector_store %arg9[%c56, %c0_17], %35 {strides = array<i32>} : memref<72x512xf32, #tpu.memory_space<vmem>>, vector<8x512xf32>,
    %c495_i32 = arith.constant 495 : i32
    %37 = tpu.dynamic_rotate %0 by %c495_i32 dim 1 : vector<8x512xf32>, i32 -> vector<8x512xf32>
    %c8_18 = arith.constant 8 : index
    %c0_19 = arith.constant 0 : index
    %38 = vector.load %arg2[%c8_18, %c0_19] : memref<9x512xf32, #tpu.memory_space<vmem>>, vector<1x512xf32>
    %39 = vector.broadcast %38 : vector<1x512xf32> to vector<8x512xf32>
    %40 = arith.mulf %37, %39 : vector<8x512xf32>
    %c64 = arith.constant 64 : index
    %c0_20 = arith.constant 0 : index
    %41 = vector.load %arg9[%c64, %c0_20] : memref<72x512xf32, #tpu.memory_space<vmem>>, vector<8x512xf32>
    tpu.vector_store %arg9[%c64, %c0_20], %40 {strides = array<i32>} : memref<72x512xf32, #tpu.memory_space<vmem>>, vector<8x512xf32>,
    %c0_21 = arith.constant 0 : index
    %c0_22 = arith.constant 0 : index
    %42 = vector.load %arg3[%c0_21, %c0_22] : memref<8x72xf32, #tpu.memory_space<vmem>>, vector<8x72xf32>
    %c0_23 = arith.constant 0 : index
    %c0_24 = arith.constant 0 : index
    %43 = vector.load %arg9[%c0_23, %c0_24] : memref<72x512xf32, #tpu.memory_space<vmem>>, vector<72x512xf32>
    %cst = arith.constant dense<0.000000e+00> : vector<8x512xf32>
    %44 = tpu.matmul %42, %43, %cst {dimension_numbers = #tpu.dot_dimension_numbers<[1], [0], [0], [1], [0, 0, 1, 1], [], []>} : vector<8x72xf32>, vector<72x512xf32>, vector<8x512xf32> -> vector<8x512xf32>
    %c0_25 = arith.constant 0 : index
    %c0_26 = arith.constant 0 : index
    %45 = vector.load %arg4[%c0_25, %c0_26] : memref<8x1xf32, #tpu.memory_space<vmem>>, vector<8x1xf32>
    %46 = vector.broadcast %45 : vector<8x1xf32> to vector<8x512xf32>
    %47 = arith.addf %44, %46 : vector<8x512xf32>
    %cst_27 = arith.constant 0.000000e+00 : f32
    %48 = vector.broadcast %cst_27 : f32 to vector<8x512xf32>
    %49 = arith.maximumf %47, %48 : vector<8x512xf32>
    %c17_i32_28 = arith.constant 17 : i32
    %50 = tpu.dynamic_rotate %49 by %c17_i32_28 dim 1 : vector<8x512xf32>, i32 -> vector<8x512xf32>
    %c0_29 = arith.constant 0 : index
    %c0_30 = arith.constant 0 : index
    %51 = vector.load %arg2[%c0_29, %c0_30] : memref<9x512xf32, #tpu.memory_space<vmem>>, vector<1x512xf32>
    %52 = vector.broadcast %51 : vector<1x512xf32> to vector<8x512xf32>
    %53 = arith.mulf %50, %52 : vector<8x512xf32>
    %c0_31 = arith.constant 0 : index
    %c0_32 = arith.constant 0 : index
    %54 = vector.load %arg9[%c0_31, %c0_32] : memref<72x512xf32, #tpu.memory_space<vmem>>, vector<8x512xf32>
    tpu.vector_store %arg9[%c0_31, %c0_32], %53 {strides = array<i32>} : memref<72x512xf32, #tpu.memory_space<vmem>>, vector<8x512xf32>,
    %c16_i32_33 = arith.constant 16 : i32
    %55 = tpu.dynamic_rotate %49 by %c16_i32_33 dim 1 : vector<8x512xf32>, i32 -> vector<8x512xf32>
    %c1_34 = arith.constant 1 : index
    %c0_35 = arith.constant 0 : index
    %56 = vector.load %arg2[%c1_34, %c0_35] : memref<9x512xf32, #tpu.memory_space<vmem>>, vector<1x512xf32>
    %57 = vector.broadcast %56 : vector<1x512xf32> to vector<8x512xf32>
    %58 = arith.mulf %55, %57 : vector<8x512xf32>
    %c8_36 = arith.constant 8 : index
    %c0_37 = arith.constant 0 : index
    %59 = vector.load %arg9[%c8_36, %c0_37] : memref<72x512xf32, #tpu.memory_space<vmem>>, vector<8x512xf32>
    tpu.vector_store %arg9[%c8_36, %c0_37], %58 {strides = array<i32>} : memref<72x512xf32, #tpu.memory_space<vmem>>, vector<8x512xf32>,
    %c15_i32_38 = arith.constant 15 : i32
    %60 = tpu.dynamic_rotate %49 by %c15_i32_38 dim 1 : vector<8x512xf32>, i32 -> vector<8x512xf32>
    %c2_39 = arith.constant 2 : index
    %c0_40 = arith.constant 0 : index
    %61 = vector.load %arg2[%c2_39, %c0_40] : memref<9x512xf32, #tpu.memory_space<vmem>>, vector<1x512xf32>
    %62 = vector.broadcast %61 : vector<1x512xf32> to vector<8x512xf32>
    %63 = arith.mulf %60, %62 : vector<8x512xf32>
    %c16_41 = arith.constant 16 : index
    %c0_42 = arith.constant 0 : index
    %64 = vector.load %arg9[%c16_41, %c0_42] : memref<72x512xf32, #tpu.memory_space<vmem>>, vector<8x512xf32>
    tpu.vector_store %arg9[%c16_41, %c0_42], %63 {strides = array<i32>} : memref<72x512xf32, #tpu.memory_space<vmem>>, vector<8x512xf32>,
    %c1_i32_43 = arith.constant 1 : i32
    %65 = tpu.dynamic_rotate %49 by %c1_i32_43 dim 1 : vector<8x512xf32>, i32 -> vector<8x512xf32>
    %c3_44 = arith.constant 3 : index
    %c0_45 = arith.constant 0 : index
    %66 = vector.load %arg2[%c3_44, %c0_45] : memref<9x512xf32, #tpu.memory_space<vmem>>, vector<1x512xf32>
    %67 = vector.broadcast %66 : vector<1x512xf32> to vector<8x512xf32>
    %68 = arith.mulf %65, %67 : vector<8x512xf32>
    %c24_46 = arith.constant 24 : index
    %c0_47 = arith.constant 0 : index
    %69 = vector.load %arg9[%c24_46, %c0_47] : memref<72x512xf32, #tpu.memory_space<vmem>>, vector<8x512xf32>
    tpu.vector_store %arg9[%c24_46, %c0_47], %68 {strides = array<i32>} : memref<72x512xf32, #tpu.memory_space<vmem>>, vector<8x512xf32>,
    %c32_48 = arith.constant 32 : index
    %c0_49 = arith.constant 0 : index
    %70 = vector.load %arg9[%c32_48, %c0_49] : memref<72x512xf32, #tpu.memory_space<vmem>>, vector<8x512xf32>
    tpu.vector_store %arg9[%c32_48, %c0_49], %49 {strides = array<i32>} : memref<72x512xf32, #tpu.memory_space<vmem>>, vector<8x512xf32>,
    %c511_i32_50 = arith.constant 511 : i32
    %71 = tpu.dynamic_rotate %49 by %c511_i32_50 dim 1 : vector<8x512xf32>, i32 -> vector<8x512xf32>
    %c5_51 = arith.constant 5 : index
    %c0_52 = arith.constant 0 : index
    %72 = vector.load %arg2[%c5_51, %c0_52] : memref<9x512xf32, #tpu.memory_space<vmem>>, vector<1x512xf32>
    %73 = vector.broadcast %72 : vector<1x512xf32> to vector<8x512xf32>
    %74 = arith.mulf %71, %73 : vector<8x512xf32>
    %c40_53 = arith.constant 40 : index
    %c0_54 = arith.constant 0 : index
    %75 = vector.load %arg9[%c40_53, %c0_54] : memref<72x512xf32, #tpu.memory_space<vmem>>, vector<8x512xf32>
    tpu.vector_store %arg9[%c40_53, %c0_54], %74 {strides = array<i32>} : memref<72x512xf32, #tpu.memory_space<vmem>>, vector<8x512xf32>,
    %c497_i32_55 = arith.constant 497 : i32
    %76 = tpu.dynamic_rotate %49 by %c497_i32_55 dim 1 : vector<8x512xf32>, i32 -> vector<8x512xf32>
    %c6_56 = arith.constant 6 : index
    %c0_57 = arith.constant 0 : index
    %77 = vector.load %arg2[%c6_56, %c0_57] : memref<9x512xf32, #tpu.memory_space<vmem>>, vector<1x512xf32>
    %78 = vector.broadcast %77 : vector<1x512xf32> to vector<8x512xf32>
    %79 = arith.mulf %76, %78 : vector<8x512xf32>
    %c48_58 = arith.constant 48 : index
    %c0_59 = arith.constant 0 : index
    %80 = vector.load %arg9[%c48_58, %c0_59] : memref<72x512xf32, #tpu.memory_space<vmem>>, vector<8x512xf32>
    tpu.vector_store %arg9[%c48_58, %c0_59], %79 {strides = array<i32>} : memref<72x512xf32, #tpu.memory_space<vmem>>, vector<8x512xf32>,
    %c496_i32_60 = arith.constant 496 : i32
    %81 = tpu.dynamic_rotate %49 by %c496_i32_60 dim 1 : vector<8x512xf32>, i32 -> vector<8x512xf32>
    %c7_61 = arith.constant 7 : index
    %c0_62 = arith.constant 0 : index
    %82 = vector.load %arg2[%c7_61, %c0_62] : memref<9x512xf32, #tpu.memory_space<vmem>>, vector<1x512xf32>
    %83 = vector.broadcast %82 : vector<1x512xf32> to vector<8x512xf32>
    %84 = arith.mulf %81, %83 : vector<8x512xf32>
    %c56_63 = arith.constant 56 : index
    %c0_64 = arith.constant 0 : index
    %85 = vector.load %arg9[%c56_63, %c0_64] : memref<72x512xf32, #tpu.memory_space<vmem>>, vector<8x512xf32>
    tpu.vector_store %arg9[%c56_63, %c0_64], %84 {strides = array<i32>} : memref<72x512xf32, #tpu.memory_space<vmem>>, vector<8x512xf32>,
    %c495_i32_65 = arith.constant 495 : i32
    %86 = tpu.dynamic_rotate %49 by %c495_i32_65 dim 1 : vector<8x512xf32>, i32 -> vector<8x512xf32>
    %c8_66 = arith.constant 8 : index
    %c0_67 = arith.constant 0 : index
    %87 = vector.load %arg2[%c8_66, %c0_67] : memref<9x512xf32, #tpu.memory_space<vmem>>, vector<1x512xf32>
    %88 = vector.broadcast %87 : vector<1x512xf32> to vector<8x512xf32>
    %89 = arith.mulf %86, %88 : vector<8x512xf32>
    %c64_68 = arith.constant 64 : index
    %c0_69 = arith.constant 0 : index
    %90 = vector.load %arg9[%c64_68, %c0_69] : memref<72x512xf32, #tpu.memory_space<vmem>>, vector<8x512xf32>
    tpu.vector_store %arg9[%c64_68, %c0_69], %89 {strides = array<i32>} : memref<72x512xf32, #tpu.memory_space<vmem>>, vector<8x512xf32>,
    %c0_70 = arith.constant 0 : index
    %c0_71 = arith.constant 0 : index
    %91 = vector.load %arg5[%c0_70, %c0_71] : memref<16x72xf32, #tpu.memory_space<vmem>>, vector<16x72xf32>
    %c0_72 = arith.constant 0 : index
    %c0_73 = arith.constant 0 : index
    %92 = vector.load %arg9[%c0_72, %c0_73] : memref<72x512xf32, #tpu.memory_space<vmem>>, vector<72x512xf32>
    %cst_74 = arith.constant dense<0.000000e+00> : vector<16x512xf32>
    %93 = tpu.matmul %91, %92, %cst_74 {dimension_numbers = #tpu.dot_dimension_numbers<[1], [0], [0], [1], [0, 0, 1, 1], [], []>} : vector<16x72xf32>, vector<72x512xf32>, vector<16x512xf32> -> vector<16x512xf32>
    %c0_75 = arith.constant 0 : index
    %c0_76 = arith.constant 0 : index
    %94 = vector.load %arg6[%c0_75, %c0_76] : memref<16x1xf32, #tpu.memory_space<vmem>>, vector<16x1xf32>
    %95 = vector.broadcast %94 : vector<16x1xf32> to vector<16x512xf32>
    %96 = arith.addf %93, %95 : vector<16x512xf32>
    %cst_77 = arith.constant 0.000000e+00 : f32
    %97 = vector.broadcast %cst_77 : f32 to vector<16x512xf32>
    %98 = arith.maximumf %96, %97 : vector<16x512xf32>
    %c511_i32_78 = arith.constant 511 : i32
    %99 = tpu.dynamic_rotate %98 by %c511_i32_78 dim 1 : vector<16x512xf32>, i32 -> vector<16x512xf32>
    %100 = arith.maximumf %98, %99 : vector<16x512xf32>
    %c496_i32_79 = arith.constant 496 : i32
    %101 = tpu.dynamic_rotate %100 by %c496_i32_79 dim 1 : vector<16x512xf32>, i32 -> vector<16x512xf32>
    %102 = arith.maximumf %100, %101 : vector<16x512xf32>
    %c0_80 = arith.constant 0 : index
    %c0_81 = arith.constant 0 : index
    %103 = vector.load %arg7[%c0_80, %c0_81] : memref<512x128xf32, #tpu.memory_space<vmem>>, vector<512x128xf32>
    %cst_82 = arith.constant dense<0.000000e+00> : vector<16x128xf32>
    %104 = tpu.matmul %102, %103, %cst_82 {dimension_numbers = #tpu.dot_dimension_numbers<[1], [0], [0], [1], [0, 0, 1, 1], [], []>} : vector<16x512xf32>, vector<512x128xf32>, vector<16x128xf32> -> vector<16x128xf32>
    %c0_83 = arith.constant 0 : index
    %c0_84 = arith.constant 0 : index
    %105 = vector.load %arg8[%c0_83, %c0_84] : memref<16x128xf32, #tpu.memory_space<vmem>>, vector<16x128xf32>
    tpu.vector_store %arg8[%c0_83, %c0_84], %104 {strides = array<i32>} : memref<16x128xf32, #tpu.memory_space<vmem>>, vector<16x128xf32>,
    return
  }
  func.func @transform_0(%arg0: i32) -> (i32, i32) {
    %c0_i32 = arith.constant 0 : i32
    %c0_i32_0 = arith.constant 0 : i32
    return %c0_i32, %arg0 : i32, i32
  }
  func.func @transform_1(%arg0: i32) -> (i32, i32) {
    %c0_i32 = arith.constant 0 : i32
    %c0_i32_0 = arith.constant 0 : i32
    %c0_i32_1 = arith.constant 0 : i32
    return %c0_i32, %c0_i32_0 : i32, i32
  }
  func.func @transform_2(%arg0: i32) -> (i32, i32) {
    %c0_i32 = arith.constant 0 : i32
    %c0_i32_0 = arith.constant 0 : i32
    %c0_i32_1 = arith.constant 0 : i32
    return %c0_i32, %c0_i32_0 : i32, i32
  }
  func.func @transform_3(%arg0: i32) -> (i32, i32) {
    %c0_i32 = arith.constant 0 : i32
    %c0_i32_0 = arith.constant 0 : i32
    %c0_i32_1 = arith.constant 0 : i32
    return %c0_i32, %c0_i32_0 : i32, i32
  }
  func.func @transform_4(%arg0: i32) -> (i32, i32) {
    %c0_i32 = arith.constant 0 : i32
    %c0_i32_0 = arith.constant 0 : i32
    %c0_i32_1 = arith.constant 0 : i32
    return %c0_i32, %c0_i32_0 : i32, i32
  }
  func.func @transform_5(%arg0: i32) -> (i32, i32) {
    %c0_i32 = arith.constant 0 : i32
    %c0_i32_0 = arith.constant 0 : i32
    %c0_i32_1 = arith.constant 0 : i32
    return %c0_i32, %c0_i32_0 : i32, i32
  }
  func.func @transform_6(%arg0: i32) -> (i32, i32) {
    %c0_i32 = arith.constant 0 : i32
    %c0_i32_0 = arith.constant 0 : i32
    %c0_i32_1 = arith.constant 0 : i32
    return %c0_i32, %c0_i32_0 : i32, i32
  }
  func.func @transform_7(%arg0: i32) -> (i32, i32) {
    %c0_i32 = arith.constant 0 : i32
    %c0_i32_0 = arith.constant 0 : i32
    return %c0_i32, %arg0 : i32, i32
  }
}

</mosaic_0001>

<llo_original>
// kernel: _deep_cnn_forward.1
$region0: #{_deep_cnn_forward.1}
  #allocation0 [shape = 'u32[]', space=smem, size = 0x4, offset = 0x4, fixed_abs, tag = 'smem constant byte address 0x4 - core index']
  #allocation1 [shape = 'u32[144,128]{1,0:T(1,128)}', space=vmem, size = 0x12000, scoped, tag = 'internal scratch']
  #allocation2 [shape = 'f32[72,512]{1,0:T(8,128)}', space=vmem, size = 0x24000, scoped, tag = 'scratch operand']
  %s0 = inlined_call_operand.vmem [shape: f32[8,512], index: 0, kind: input, shape index: {}]
  %s1 = inlined_call_operand.vmem [shape: f32[9,512], index: 1, kind: input, shape index: {}]
  %s2 = inlined_call_operand.vmem [shape: f32[8,72], index: 2, kind: input, shape index: {}]
  %s3 = inlined_call_operand.vmem [shape: f32[8,1], index: 3, kind: input, shape index: {}]
  %s4 = inlined_call_operand.vmem [shape: f32[16,72], index: 4, kind: input, shape index: {}]
  %s5 = inlined_call_operand.vmem [shape: f32[16,1], index: 5, kind: input, shape index: {}]
  %s6 = inlined_call_operand.vmem [shape: f32[512,128], index: 6, kind: input, shape index: {}]
  %s7 = inlined_call_operand.vmem [shape: f32[16,128], index: 7, kind: output, shape index: {}]
  %s8 = sld [smem:[#allocation0]]
  $region38: #{_deep_cnn_forward.1} parent=0
    _
  %s10 = ssub.s32 1, %s8
  %s11 = scalar_select 0, %s10, %s8
  // Predicated region
  $region2: #{_deep_cnn_forward.1} parent=0 // pred_check
    _
  $region3: #{_deep_cnn_forward.1} parent=0 // pred_check_branch
    %13 = sbr.rel (0) target = $region5
  $region4: #{_deep_cnn_forward.1} parent=0 // pred_region
    _
  $region5: #{_deep_cnn_forward.1} parent=0 // pred_fallthru
    _
  // Predicated region
  $region6: #{_deep_cnn_forward.1} parent=0 // pred_check
    _
  $region7: #{_deep_cnn_forward.1} parent=0 // pred_check_branch
    %15 = sbr.rel (0) target = $region9
  $region8: #{_deep_cnn_forward.1} parent=0 // pred_region
    _
  $region9: #{_deep_cnn_forward.1} parent=0 // pred_fallthru
    _
  // Predicated region
  $region10: #{_deep_cnn_forward.1} parent=0 // pred_check
    _
  $region11: #{_deep_cnn_forward.1} parent=0 // pred_check_branch
    %17 = sbr.rel (0) target = $region13
  $region12: #{_deep_cnn_forward.1} parent=0 // pred_region
    _
  $region13: #{_deep_cnn_forward.1} parent=0 // pred_fallthru
    _
  // Predicated region
  $region14: #{_deep_cnn_forward.1} parent=0 // pred_check
    _
  $region15: #{_deep_cnn_forward.1} parent=0 // pred_check_branch
    %19 = sbr.rel (0) target = $region17
  $region16: #{_deep_cnn_forward.1} parent=0 // pred_region
    _
  $region17: #{_deep_cnn_forward.1} parent=0 // pred_fallthru
    _
  // Predicated region
  $region18: #{_deep_cnn_forward.1} parent=0 // pred_check
    _
  $region19: #{_deep_cnn_forward.1} parent=0 // pred_check_branch
    %21 = sbr.rel (0) target = $region21
  $region20: #{_deep_cnn_forward.1} parent=0 // pred_region
    _
  $region21: #{_deep_cnn_forward.1} parent=0 // pred_fallthru
    _
  // Predicated region
  $region22: #{_deep_cnn_forward.1} parent=0 // pred_check
    _
  $region23: #{_deep_cnn_forward.1} parent=0 // pred_check_branch
    %23 = sbr.rel (0) target = $region25
  $region24: #{_deep_cnn_forward.1} parent=0 // pred_region
    _
  $region25: #{_deep_cnn_forward.1} parent=0 // pred_fallthru
    _
  // Predicated region
  $region26: #{_deep_cnn_forward.1} parent=0 // pred_check
    _
  $region27: #{_deep_cnn_forward.1} parent=0 // pred_check_branch
    %25 = sbr.rel (0) target = $region29
  $region28: #{_deep_cnn_forward.1} parent=0 // pred_region
    _
  $region29: #{_deep_cnn_forward.1} parent=0 // pred_fallthru
    _
  %v26 = vld [vmem:[%s0] sm:$0xff]
  %v27 = vld [vmem:[%s0 + $0x8] sm:$0xff]
  %v28 = vld [vmem:[%s0 + $0x10] sm:$0xff]
  %v29 = vld [vmem:[%s0 + $0x18] sm:$0xff]
  %30 = vrot.lane.b32.xlu0 %v26, 17
  %v31 = vpop.permute.xlu0 %30
  %32 = vrot.lane.b32.xlu0 %v27, 17
  %v33 = vpop.permute.xlu0 %32
  %34 = vrot.lane.b32.xlu0 %v28, 17
  %v35 = vpop.permute.xlu0 %34
  %36 = vrot.lane.b32.xlu0 %v29, 17
  %v37 = vpop.permute.xlu0 %36
  %v38 = vlaneseq
  %v39 = vand.u32 %v38, 127
  %vm40 = vcmp.lt.s32.totalorder %v39, 17
  %v41 = vsel %vm40, %v35, %v37
  %v42 = vsel %vm40, %v33, %v35
  %v43 = vsel %vm40, %v31, %v33
  %v44 = vsel %vm40, %v37, %v31
  %v45 = vld [vmem:[%s1] ss:$8 sm:$0xf]
  %v47 = vlaneseq
  %v48 = vshrl.u32 %v47, 7
  %v49 = vsub.s32 0, %v48
  %v50 = vrot.slane %v45, %v49
  %v51 = vlaneseq
  %v52 = vshrl.u32 %v51, 7
  %v53 = vsub.s32 1, %v52
  %v54 = vrot.slane %v45, %v53
  %v55 = vlaneseq
  %v56 = vshrl.u32 %v55, 7
  %v57 = vsub.s32 2, %v56
  %v58 = vrot.slane %v45, %v57
  %v59 = vlaneseq
  %v60 = vshrl.u32 %v59, 7
  %v61 = vsub.s32 3, %v60
  %v62 = vrot.slane %v45, %v61
  %v67 = vmul.f32 %v44, %v50
  %v68 = vmul.f32 %v43, %v54
  %v69 = vmul.f32 %v42, %v58
  %v70 = vmul.f32 %v41, %v62
  %71 = vst [vmem:[#allocation2] sm:$0xff] %v67
  %72 = vst [vmem:[#allocation2 + $0x8] sm:$0xff] %v68
  %73 = vst [vmem:[#allocation2 + $0x10] sm:$0xff] %v69
  %74 = vst [vmem:[#allocation2 + $0x18] sm:$0xff] %v70
  %75 = vrot.lane.b32.xlu0 %v26, 16
  %v76 = vpop.permute.xlu0 %75
  %77 = vrot.lane.b32.xlu0 %v27, 16
  %v78 = vpop.permute.xlu0 %77
  %79 = vrot.lane.b32.xlu0 %v28, 16
  %v80 = vpop.permute.xlu0 %79
  %81 = vrot.lane.b32.xlu0 %v29, 16
  %v82 = vpop.permute.xlu0 %81
  %vm83 = vcmp.lt.s32.totalorder %v39, 16
  %v84 = vsel %vm83, %v80, %v82
  %v85 = vsel %vm83, %v78, %v80
  %v86 = vsel %vm83, %v76, %v78
  %v87 = vsel %vm83, %v82, %v76
  %s88 = scalar_lea.vmem %s1, 1
  %v89 = vld [vmem:[%s88] ss:$8 sm:$0xf]
  %v91 = vlaneseq
  %v92 = vshrl.u32 %v91, 7
  %v93 = vsub.s32 0, %v92
  %v94 = vrot.slane %v89, %v93
  %v95 = vlaneseq
  %v96 = vshrl.u32 %v95, 7
  %v97 = vsub.s32 1, %v96
  %v98 = vrot.slane %v89, %v97
  %v99 = vlaneseq
  %v100 = vshrl.u32 %v99, 7
  %v101 = vsub.s32 2, %v100
  %v102 = vrot.slane %v89, %v101
  %v103 = vlaneseq
  %v104 = vshrl.u32 %v103, 7
  %v105 = vsub.s32 3, %v104
  %v106 = vrot.slane %v89, %v105
  %v111 = vmul.f32 %v87, %v94
  %v112 = vmul.f32 %v86, %v98
  %v113 = vmul.f32 %v85, %v102
  %v114 = vmul.f32 %v84, %v106
  %115 = vst [vmem:[#allocation2 + $0x20] sm:$0xff] %v111
  %116 = vst [vmem:[#allocation2 + $0x28] sm:$0xff] %v112
  %117 = vst [vmem:[#allocation2 + $0x30] sm:$0xff] %v113
  %118 = vst [vmem:[#allocation2 + $0x38] sm:$0xff] %v114
  %119 = vrot.lane.b32.xlu0 %v26, 15
  %v120 = vpop.permute.xlu0 %119
  %121 = vrot.lane.b32.xlu0 %v27, 15
  %v122 = vpop.permute.xlu0 %121
  %123 = vrot.lane.b32.xlu0 %v28, 15
  %v124 = vpop.permute.xlu0 %123
  %125 = vrot.lane.b32.xlu0 %v29, 15
  %v126 = vpop.permute.xlu0 %125
  %vm127 = vcmp.lt.s32.totalorder %v39, 15
  %v128 = vsel %vm127, %v124, %v126
  %v129 = vsel %vm127, %v122, %v124
  %v130 = vsel %vm127, %v120, %v122
  %v131 = vsel %vm127, %v126, %v120
  %s132 = scalar_lea.vmem %s1, 2
  %v133 = vld [vmem:[%s132] ss:$8 sm:$0xf]
  %v135 = vlaneseq
  %v136 = vshrl.u32 %v135, 7
  %v137 = vsub.s32 0, %v136
  %v138 = vrot.slane %v133, %v137
  %v139 = vlaneseq
  %v140 = vshrl.u32 %v139, 7
  %v141 = vsub.s32 1, %v140
  %v142 = vrot.slane %v133, %v141
  %v143 = vlaneseq
  %v144 = vshrl.u32 %v143, 7
  %v145 = vsub.s32 2, %v144
  %v146 = vrot.slane %v133, %v145
  %v147 = vlaneseq
  %v148 = vshrl.u32 %v147, 7
  %v149 = vsub.s32 3, %v148
  %v150 = vrot.slane %v133, %v149
  %v155 = vmul.f32 %v131, %v138
  %v156 = vmul.f32 %v130, %v142
  %v157 = vmul.f32 %v129, %v146
  %v158 = vmul.f32 %v128, %v150
  %159 = vst [vmem:[#allocation2 + $0x40] sm:$0xff] %v155
  %160 = vst [vmem:[#allocation2 + $0x48] sm:$0xff] %v156
  %161 = vst [vmem:[#allocation2 + $0x50] sm:$0xff] %v157
  %162 = vst [vmem:[#allocation2 + $0x58] sm:$0xff] %v158
  %163 = vrot.lane.b32.xlu0 %v26, 1
  %v164 = vpop.permute.xlu0 %163
  %165 = vrot.lane.b32.xlu0 %v27, 1
  %v166 = vpop.permute.xlu0 %165
  %167 = vrot.lane.b32.xlu0 %v28, 1
  %v168 = vpop.permute.xlu0 %167
  %169 = vrot.lane.b32.xlu0 %v29, 1
  %v170 = vpop.permute.xlu0 %169
  %vm171 = vcmp.lt.s32.totalorder %v39, 1
  %v172 = vsel %vm171, %v168, %v170
  %v173 = vsel %vm171, %v166, %v168
  %v174 = vsel %vm171, %v164, %v166
  %v175 = vsel %vm171, %v170, %v164
  %s176 = scalar_lea.vmem %s1, 3
  %v177 = vld [vmem:[%s176] ss:$8 sm:$0xf]
  %v179 = vlaneseq
  %v180 = vshrl.u32 %v179, 7
  %v181 = vsub.s32 0, %v180
  %v182 = vrot.slane %v177, %v181
  %v183 = vlaneseq
  %v184 = vshrl.u32 %v183, 7
  %v185 = vsub.s32 1, %v184
  %v186 = vrot.slane %v177, %v185
  %v187 = vlaneseq
  %v188 = vshrl.u32 %v187, 7
  %v189 = vsub.s32 2, %v188
  %v190 = vrot.slane %v177, %v189
  %v191 = vlaneseq
  %v192 = vshrl.u32 %v191, 7
  %v193 = vsub.s32 3, %v192
  %v194 = vrot.slane %v177, %v193
  %v199 = vmul.f32 %v175, %v182
  %v200 = vmul.f32 %v174, %v186
  %v201 = vmul.f32 %v173, %v190
  %v202 = vmul.f32 %v172, %v194
  %203 = vst [vmem:[#allocation2 + $0x60] sm:$0xff] %v199
  %204 = vst [vmem:[#allocation2 + $0x68] sm:$0xff] %v200
  %205 = vst [vmem:[#allocation2 + $0x70] sm:$0xff] %v201
  %206 = vst [vmem:[#allocation2 + $0x78] sm:$0xff] %v202
  %207 = vst [vmem:[#allocation2 + $0x80] sm:$0xff] %v26
  %208 = vst [vmem:[#allocation2 + $0x88] sm:$0xff] %v27
  %209 = vst [vmem:[#allocation2 + $0x90] sm:$0xff] %v28
  %210 = vst [vmem:[#allocation2 + $0x98] sm:$0xff] %v29
  %211 = vrot.lane.b32.xlu0 %v26, 127
  %v212 = vpop.permute.xlu0 %211
  %213 = vrot.lane.b32.xlu0 %v27, 127
  %v214 = vpop.permute.xlu0 %213
  %215 = vrot.lane.b32.xlu0 %v28, 127
  %v216 = vpop.permute.xlu0 %215
  %217 = vrot.lane.b32.xlu0 %v29, 127
  %v218 = vpop.permute.xlu0 %217
  %vm219 = vcmp.lt.s32.totalorder %v39, 127
  %v220 = vsel %vm219, %v216, %v218
  %v221 = vsel %vm219, %v214, %v216
  %v222 = vsel %vm219, %v212, %v214
  %v223 = vsel %vm219, %v218, %v212
  %s224 = scalar_lea.vmem %s1, 5
  %v225 = vld [vmem:[%s224] ss:$8 sm:$0xf]
  %v227 = vlaneseq
  %v228 = vshrl.u32 %v227, 7
  %v229 = vsub.s32 0, %v228
  %v230 = vrot.slane %v225, %v229
  %v231 = vlaneseq
  %v232 = vshrl.u32 %v231, 7
  %v233 = vsub.s32 1, %v232
  %v234 = vrot.slane %v225, %v233
  %v235 = vlaneseq
  %v236 = vshrl.u32 %v235, 7
  %v237 = vsub.s32 2, %v236
  %v238 = vrot.slane %v225, %v237
  %v239 = vlaneseq
  %v240 = vshrl.u32 %v239, 7
  %v241 = vsub.s32 3, %v240
  %v242 = vrot.slane %v225, %v241
  %v247 = vmul.f32 %v222, %v230
  %v248 = vmul.f32 %v221, %v234
  %v249 = vmul.f32 %v220, %v238
  %v250 = vmul.f32 %v223, %v242
  %251 = vst [vmem:[#allocation2 + $0xa0] sm:$0xff] %v247
  %252 = vst [vmem:[#allocation2 + $0xa8] sm:$0xff] %v248
  %253 = vst [vmem:[#allocation2 + $0xb0] sm:$0xff] %v249
  %254 = vst [vmem:[#allocation2 + $0xb8] sm:$0xff] %v250
  %255 = vrot.lane.b32.xlu0 %v26, 113
  %v256 = vpop.permute.xlu0 %255
  %257 = vrot.lane.b32.xlu0 %v27, 113
  %v258 = vpop.permute.xlu0 %257
  %259 = vrot.lane.b32.xlu0 %v28, 113
  %v260 = vpop.permute.xlu0 %259
  %261 = vrot.lane.b32.xlu0 %v29, 113
  %v262 = vpop.permute.xlu0 %261
  %vm263 = vcmp.lt.s32.totalorder %v39, 113
  %v264 = vsel %vm263, %v260, %v262
  %v265 = vsel %vm263, %v258, %v260
  %v266 = vsel %vm263, %v256, %v258
  %v267 = vsel %vm263, %v262, %v256
  %s268 = scalar_lea.vmem %s1, 6
  %v269 = vld [vmem:[%s268] ss:$8 sm:$0xf]
  %v271 = vlaneseq
  %v272 = vshrl.u32 %v271, 7
  %v273 = vsub.s32 0, %v272
  %v274 = vrot.slane %v269, %v273
  %v275 = vlaneseq
  %v276 = vshrl.u32 %v275, 7
  %v277 = vsub.s32 1, %v276
  %v278 = vrot.slane %v269, %v277
  %v279 = vlaneseq
  %v280 = vshrl.u32 %v279, 7
  %v281 = vsub.s32 2, %v280
  %v282 = vrot.slane %v269, %v281
  %v283 = vlaneseq
  %v284 = vshrl.u32 %v283, 7
  %v285 = vsub.s32 3, %v284
  %v286 = vrot.slane %v269, %v285
  %v291 = vmul.f32 %v266, %v274
  %v292 = vmul.f32 %v265, %v278
  %v293 = vmul.f32 %v264, %v282
  %v294 = vmul.f32 %v267, %v286
  %295 = vst [vmem:[#allocation2 + $0xc0] sm:$0xff] %v291
  %296 = vst [vmem:[#allocation2 + $0xc8] sm:$0xff] %v292
  %297 = vst [vmem:[#allocation2 + $0xd0] sm:$0xff] %v293
  %298 = vst [vmem:[#allocation2 + $0xd8] sm:$0xff] %v294
  %299 = vrot.lane.b32.xlu0 %v26, 112
  %v300 = vpop.permute.xlu0 %299
  %301 = vrot.lane.b32.xlu0 %v27, 112
  %v302 = vpop.permute.xlu0 %301
  %303 = vrot.lane.b32.xlu0 %v28, 112
  %v304 = vpop.permute.xlu0 %303
  %305 = vrot.lane.b32.xlu0 %v29, 112
  %v306 = vpop.permute.xlu0 %305
  %vm307 = vcmp.lt.s32.totalorder %v39, 112
  %v308 = vsel %vm307, %v304, %v306
  %v309 = vsel %vm307, %v302, %v304
  %v310 = vsel %vm307, %v300, %v302
  %v311 = vsel %vm307, %v306, %v300
  %s312 = scalar_lea.vmem %s1, 7
  %v313 = vld [vmem:[%s312] ss:$8 sm:$0xf]
  %v315 = vlaneseq
  %v316 = vshrl.u32 %v315, 7
  %v317 = vsub.s32 0, %v316
  %v318 = vrot.slane %v313, %v317
  %v319 = vlaneseq
  %v320 = vshrl.u32 %v319, 7
  %v321 = vsub.s32 1, %v320
  %v322 = vrot.slane %v313, %v321
  %v323 = vlaneseq
  %v324 = vshrl.u32 %v323, 7
  %v325 = vsub.s32 2, %v324
  %v326 = vrot.slane %v313, %v325
  %v327 = vlaneseq
  %v328 = vshrl.u32 %v327, 7
  %v329 = vsub.s32 3, %v328
  %v330 = vrot.slane %v313, %v329
  %v335 = vmul.f32 %v310, %v318
  %v336 = vmul.f32 %v309, %v322
  %v337 = vmul.f32 %v308, %v326
  %v338 = vmul.f32 %v311, %v330
  %339 = vst [vmem:[#allocation2 + $0xe0] sm:$0xff] %v335
  %340 = vst [vmem:[#allocation2 + $0xe8] sm:$0xff] %v336
  %341 = vst [vmem:[#allocation2 + $0xf0] sm:$0xff] %v337
  %342 = vst [vmem:[#allocation2 + $0xf8] sm:$0xff] %v338
  %343 = vrot.lane.b32.xlu0 %v26, 111
  %v344 = vpop.permute.xlu0 %343
  %345 = vrot.lane.b32.xlu0 %v27, 111
  %v346 = vpop.permute.xlu0 %345
  %347 = vrot.lane.b32.xlu0 %v28, 111
  %v348 = vpop.permute.xlu0 %347
  %349 = vrot.lane.b32.xlu0 %v29, 111
  %v350 = vpop.permute.xlu0 %349
  %vm351 = vcmp.lt.s32.totalorder %v39, 111
  %v352 = vsel %vm351, %v348, %v350
  %v353 = vsel %vm351, %v346, %v348
  %v354 = vsel %vm351, %v344, %v346
  %v355 = vsel %vm351, %v350, %v344
  %s356 = scalar_lea.vmem %s1, 32
  %v357 = vld [vmem:[%s356] ss:$8 sm:$0xf]
  %v359 = vlaneseq
  %v360 = vshrl.u32 %v359, 7
  %v361 = vsub.s32 0, %v360
  %v362 = vrot.slane %v357, %v361
  %v363 = vlaneseq
  %v364 = vshrl.u32 %v363, 7
  %v365 = vsub.s32 1, %v364
  %v366 = vrot.slane %v357, %v365
  %v367 = vlaneseq
  %v368 = vshrl.u32 %v367, 7
  %v369 = vsub.s32 2, %v368
  %v370 = vrot.slane %v357, %v369
  %v371 = vlaneseq
  %v372 = vshrl.u32 %v371, 7
  %v373 = vsub.s32 3, %v372
  %v374 = vrot.slane %v357, %v373
  %v379 = vmul.f32 %v354, %v362
  %v380 = vmul.f32 %v353, %v366
  %v381 = vmul.f32 %v352, %v370
  %v382 = vmul.f32 %v355, %v374
  %383 = vst [vmem:[#allocation2 + $0x100] sm:$0xff] %v379
  %384 = vst [vmem:[#allocation2 + $0x108] sm:$0xff] %v380
  %385 = vst [vmem:[#allocation2 + $0x110] sm:$0xff] %v381
  %386 = vst [vmem:[#allocation2 + $0x118] sm:$0xff] %v382
  %v387 = vld [vmem:[%s2] sm:$0xff]
  %v388 = vld [vmem:[#allocation2] sm:$0xff]
  %v389 = vld [vmem:[#allocation2 + $0x8] sm:$0xff]
  %v390 = vld [vmem:[#allocation2 + $0x10] sm:$0xff]
  %v391 = vld [vmem:[#allocation2 + $0x18] sm:$0xff]
  %v392 = vld [vmem:[#allocation2 + $0x20] sm:$0xff]
  %v393 = vld [vmem:[#allocation2 + $0x28] sm:$0xff]
  %v394 = vld [vmem:[#allocation2 + $0x30] sm:$0xff]
  %v395 = vld [vmem:[#allocation2 + $0x38] sm:$0xff]
  %v396 = vld [vmem:[#allocation2 + $0x40] sm:$0xff]
  %v397 = vld [vmem:[#allocation2 + $0x48] sm:$0xff]
  %v398 = vld [vmem:[#allocation2 + $0x50] sm:$0xff]
  %v399 = vld [vmem:[#allocation2 + $0x58] sm:$0xff]
  %v400 = vld [vmem:[#allocation2 + $0x60] sm:$0xff]
  %v401 = vld [vmem:[#allocation2 + $0x68] sm:$0xff]
  %v402 = vld [vmem:[#allocation2 + $0x70] sm:$0xff]
  %v403 = vld [vmem:[#allocation2 + $0x78] sm:$0xff]
  %v404 = vld [vmem:[#allocation2 + $0x80] sm:$0xff]
  %v405 = vld [vmem:[#allocation2 + $0x88] sm:$0xff]
  %v406 = vld [vmem:[#allocation2 + $0x90] sm:$0xff]
  %v407 = vld [vmem:[#allocation2 + $0x98] sm:$0xff]
  %v408 = vld [vmem:[#allocation2 + $0xa0] sm:$0xff]
  %v409 = vld [vmem:[#allocation2 + $0xa8] sm:$0xff]
  %v410 = vld [vmem:[#allocation2 + $0xb0] sm:$0xff]
  %v411 = vld [vmem:[#allocation2 + $0xb8] sm:$0xff]
  %v412 = vld [vmem:[#allocation2 + $0xc0] sm:$0xff]
  %v413 = vld [vmem:[#allocation2 + $0xc8] sm:$0xff]
  %v414 = vld [vmem:[#allocation2 + $0xd0] sm:$0xff]
  %v415 = vld [vmem:[#allocation2 + $0xd8] sm:$0xff]
  %v416 = vld [vmem:[#allocation2 + $0xe0] sm:$0xff]
  %v417 = vld [vmem:[#allocation2 + $0xe8] sm:$0xff]
  %v418 = vld [vmem:[#allocation2 + $0xf0] sm:$0xff]
  %v419 = vld [vmem:[#allocation2 + $0xf8] sm:$0xff]
  %v420 = vld [vmem:[#allocation2 + $0x100] sm:$0xff]
  %v421 = vld [vmem:[#allocation2 + $0x108] sm:$0xff]
  %v422 = vld [vmem:[#allocation2 + $0x110] sm:$0xff]
  %v423 = vld [vmem:[#allocation2 + $0x118] sm:$0xff]
  %v424 = vld [vmem:[%s3] sm:$0xff]
  %426 = vset.pattern.permute.xlu0 0
  %427 = vperm.xlu0 %426, %v424
  %v428 = vpop.permute.xlu0 %427
  %vm430 = vcmask 588800
  %v432 = vsel %vm430, %v387, 0
  %434 = vmatprep.subr.mxu0 %v389
  %435 = vmatpush1.msra.mxu0 %v388
  %436 = vmatprep.subr.mxu0 %v393
  %437 = vmatpush1.msra.mxu0 %v392
  %438 = vmatprep.subr.mxu0 %v397
  %439 = vmatpush1.msra.mxu0 %v396
  %440 = vmatprep.subr.mxu0 %v401
  %441 = vmatpush1.msra.mxu0 %v400
  %442 = vmatprep.subr.mxu0 %v405
  %443 = vmatpush1.msra.mxu0 %v404
  %444 = vmatprep.subr.mxu0 %v409
  %445 = vmatpush1.msra.mxu0 %v408
  %446 = vmatprep.subr.mxu0 %v413
  %447 = vmatpush1.msra.mxu0 %v412
  %448 = vmatprep.subr.mxu0 %v417
  %449 = vmatpush1.msra.mxu0 %v416
  %450 = vmatprep.subr.mxu0 %v421
  %451 = vmatpush1.msra.mxu0 %v420
  %452 = vmatprep.subr.mxu0 0.0
  %453 = vmatpush1.msra.mxu0 0.0
  %454 = vmatprep.subr.mxu0 0.0
  %455 = vmatpush1.msra.mxu0 0.0
  %456 = vmatprep.subr.mxu0 0.0
  %457 = vmatpush1.msra.mxu0 0.0
  %458 = vmatprep.subr.mxu0 0.0
  %459 = vmatpush1.msra.mxu0 0.0
  %460 = vmatprep.subr.mxu0 0.0
  %461 = vmatpush1.msra.mxu0 0.0
  %462 = vmatprep.subr.mxu0 0.0
  %463 = vmatpush1.msra.mxu0 0.0
  %464 = vmatprep.subr.mxu0 0.0
  %465 = vmatpush1.msra.mxu0 0.0
  %466 = vmatprep.subr.mxu0 0.0
  %467 = vmatpush1.msra.mxu0 0.0
  %468 = vmatprep.subr.mxu0 0.0
  %469 = vmatpush1.msra.mxu0 0.0
  %470 = vmatprep.subr.mxu0 0.0
  %471 = vmatpush1.msra.mxu0 0.0
  %472 = vmatprep.subr.mxu0 0.0
  %473 = vmatpush1.msra.mxu0 0.0
  %474 = vmatprep.subr.mxu0 0.0
  %475 = vmatpush1.msra.mxu0 0.0
  %476 = vmatprep.subr.mxu0 0.0
  %477 = vmatpush1.msra.mxu0 0.0
  %478 = vmatprep.subr.mxu0 0.0
  %479 = vmatpush1.msra.mxu0 0.0
  %480 = vmatprep.subr.mxu0 0.0
  %481 = vmatpush1.msra.mxu0 0.0
  %482 = vmatprep.subr.mxu0 0.0
  %483 = vmatpush1.msra.mxu0 0.0
  %484 = vmatprep.subr.mxu0 0.0
  %485 = vmatpush1.msra.mxu0 0.0
  %486 = vmatprep.subr.mxu0 0.0
  %487 = vmatpush1.msra.mxu0 0.0
  %488 = vmatprep.subr.mxu0 0.0
  %489 = vmatpush1.msra.mxu0 0.0
  %490 = vmatprep.subr.mxu0 0.0
  %491 = vmatpush1.msra.mxu0 0.0
  %492 = vmatprep.subr.mxu0 0.0
  %493 = vmatpush1.msra.mxu0 0.0
  %494 = vmatprep.subr.mxu0 0.0
  %495 = vmatpush1.msra.mxu0 0.0
  %496 = vmatprep.subr.mxu0 0.0
  %497 = vmatpush1.msra.mxu0 0.0
  %498 = vmatprep.mubr.f32.mxu0 0.0
  %499 = vmatmul.mubr.f32.gmra.mrb[0].mxu0 %v432
  %v500 = vpop.f32.mrb[0].mxu0
  %v501 = vadd.f32 %v428, %v500
  %v502 = vpop.f32.mrb[0].mxu0
  %v503 = vadd.f32 %v428, %v502
  %504 = vdwg.mxu0
  %505 = vmatprep.subr.mxu0 %v391
  %506 = vmatpush1.msra.mxu0 %v390
  %507 = vmatprep.subr.mxu0 %v395
  %508 = vmatpush1.msra.mxu0 %v394
  %509 = vmatprep.subr.mxu0 %v399
  %510 = vmatpush1.msra.mxu0 %v398
  %511 = vmatprep.subr.mxu0 %v403
  %512 = vmatpush1.msra.mxu0 %v402
  %513 = vmatprep.subr.mxu0 %v407
  %514 = vmatpush1.msra.mxu0 %v406
  %515 = vmatprep.subr.mxu0 %v411
  %516 = vmatpush1.msra.mxu0 %v410
  %517 = vmatprep.subr.mxu0 %v415
  %518 = vmatpush1.msra.mxu0 %v414
  %519 = vmatprep.subr.mxu0 %v419
  %520 = vmatpush1.msra.mxu0 %v418
  %521 = vmatprep.subr.mxu0 %v423
  %522 = vmatpush1.msra.mxu0 %v422
  %523 = vmatprep.subr.mxu0 0.0
  %524 = vmatpush1.msra.mxu0 0.0
  %525 = vmatprep.subr.mxu0 0.0
  %526 = vmatpush1.msra.mxu0 0.0
  %527 = vmatprep.subr.mxu0 0.0
  %528 = vmatpush1.msra.mxu0 0.0
  %529 = vmatprep.subr.mxu0 0.0
  %530 = vmatpush1.msra.mxu0 0.0
  %531 = vmatprep.subr.mxu0 0.0
  %532 = vmatpush1.msra.mxu0 0.0
  %533 = vmatprep.subr.mxu0 0.0
  %534 = vmatpush1.msra.mxu0 0.0
  %535 = vmatprep.subr.mxu0 0.0
  %536 = vmatpush1.msra.mxu0 0.0
  %537 = vmatprep.subr.mxu0 0.0
  %538 = vmatpush1.msra.mxu0 0.0
  %539 = vmatprep.subr.mxu0 0.0
  %540 = vmatpush1.msra.mxu0 0.0
  %541 = vmatprep.subr.mxu0 0.0
  %542 = vmatpush1.msra.mxu0 0.0
  %543 = vmatprep.subr.mxu0 0.0
  %544 = vmatpush1.msra.mxu0 0.0
  %545 = vmatprep.subr.mxu0 0.0
  %546 = vmatpush1.msra.mxu0 0.0
  %547 = vmatprep.subr.mxu0 0.0
  %548 = vmatpush1.msra.mxu0 0.0
  %549 = vmatprep.subr.mxu0 0.0
  %550 = vmatpush1.msra.mxu0 0.0
  %551 = vmatprep.subr.mxu0 0.0
  %552 = vmatpush1.msra.mxu0 0.0
  %553 = vmatprep.subr.mxu0 0.0
  %554 = vmatpush1.msra.mxu0 0.0
  %555 = vmatprep.subr.mxu0 0.0
  %556 = vmatpush1.msra.mxu0 0.0
  %557 = vmatprep.subr.mxu0 0.0
  %558 = vmatpush1.msra.mxu0 0.0
  %559 = vmatprep.subr.mxu0 0.0
  %560 = vmatpush1.msra.mxu0 0.0
  %561 = vmatprep.subr.mxu0 0.0
  %562 = vmatpush1.msra.mxu0 0.0
  %563 = vmatprep.subr.mxu0 0.0
  %564 = vmatpush1.msra.mxu0 0.0
  %565 = vmatprep.subr.mxu0 0.0
  %566 = vmatpush1.msra.mxu0 0.0
  %567 = vmatprep.subr.mxu0 0.0
  %568 = vmatpush1.msra.mxu0 0.0
  %569 = vmatprep.mubr.f32.mxu0 0.0
  %570 = vmatmul.mubr.f32.gmra.mrb[0].mxu0 %v432
  %v571 = vpop.f32.mrb[0].mxu0
  %v572 = vadd.f32 %v428, %v571
  %v573 = vpop.f32.mrb[0].mxu0
  %v574 = vadd.f32 %v428, %v573
  %575 = vdwg.mxu0
  %v576 = vmax.f32 %v501, 0.0
  %v577 = vmax.f32 %v503, 0.0
  %v578 = vmax.f32 %v572, 0.0
  %v579 = vmax.f32 %v574, 0.0
  %580 = vrot.lane.b32.xlu0 %v576, 17
  %v581 = vpop.permute.xlu0 %580
  %582 = vrot.lane.b32.xlu0 %v577, 17
  %v583 = vpop.permute.xlu0 %582
  %584 = vrot.lane.b32.xlu0 %v578, 17
  %v585 = vpop.permute.xlu0 %584
  %586 = vrot.lane.b32.xlu0 %v579, 17
  %v587 = vpop.permute.xlu0 %586
  %v588 = vsel %vm40, %v585, %v587
  %v589 = vsel %vm40, %v583, %v585
  %v590 = vsel %vm40, %v581, %v583
  %v591 = vsel %vm40, %v587, %v581
  %v592 = vld [vmem:[%s1] ss:$8 sm:$0xf]
  %v594 = vlaneseq
  %v595 = vshrl.u32 %v594, 7
  %v596 = vsub.s32 0, %v595
  %v597 = vrot.slane %v592, %v596
  %v598 = vlaneseq
  %v599 = vshrl.u32 %v598, 7
  %v600 = vsub.s32 1, %v599
  %v601 = vrot.slane %v592, %v600
  %v602 = vlaneseq
  %v603 = vshrl.u32 %v602, 7
  %v604 = vsub.s32 2, %v603
  %v605 = vrot.slane %v592, %v604
  %v606 = vlaneseq
  %v607 = vshrl.u32 %v606, 7
  %v608 = vsub.s32 3, %v607
  %v609 = vrot.slane %v592, %v608
  %v614 = vmul.f32 %v591, %v597
  %v615 = vmul.f32 %v590, %v601
  %v616 = vmul.f32 %v589, %v605
  %v617 = vmul.f32 %v588, %v609
  %618 = vst [vmem:[#allocation2] sm:$0xff] %v614
  %619 = vst [vmem:[#allocation2 + $0x8] sm:$0xff] %v615
  %620 = vst [vmem:[#allocation2 + $0x10] sm:$0xff] %v616
  %621 = vst [vmem:[#allocation2 + $0x18] sm:$0xff] %v617
  %622 = vrot.lane.b32.xlu0 %v576, 16
  %v623 = vpop.permute.xlu0 %622
  %624 = vrot.lane.b32.xlu0 %v577, 16
  %v625 = vpop.permute.xlu0 %624
  %626 = vrot.lane.b32.xlu0 %v578, 16
  %v627 = vpop.permute.xlu0 %626
  %628 = vrot.lane.b32.xlu0 %v579, 16
  %v629 = vpop.permute.xlu0 %628
  %v630 = vsel %vm83, %v627, %v629
  %v631 = vsel %vm83, %v625, %v627
  %v632 = vsel %vm83, %v623, %v625
  %v633 = vsel %vm83, %v629, %v623
  %v634 = vld [vmem:[%s88] ss:$8 sm:$0xf]
  %v636 = vlaneseq
  %v637 = vshrl.u32 %v636, 7
  %v638 = vsub.s32 0, %v637
  %v639 = vrot.slane %v634, %v638
  %v640 = vlaneseq
  %v641 = vshrl.u32 %v640, 7
  %v642 = vsub.s32 1, %v641
  %v643 = vrot.slane %v634, %v642
  %v644 = vlaneseq
  %v645 = vshrl.u32 %v644, 7
  %v646 = vsub.s32 2, %v645
  %v647 = vrot.slane %v634, %v646
  %v648 = vlaneseq
  %v649 = vshrl.u32 %v648, 7
  %v650 = vsub.s32 3, %v649
  %v651 = vrot.slane %v634, %v650
  %v656 = vmul.f32 %v633, %v639
  %v657 = vmul.f32 %v632, %v643
  %v658 = vmul.f32 %v631, %v647
  %v659 = vmul.f32 %v630, %v651
  %660 = vst [vmem:[#allocation2 + $0x20] sm:$0xff] %v656
  %661 = vst [vmem:[#allocation2 + $0x28] sm:$0xff] %v657
  %662 = vst [vmem:[#allocation2 + $0x30] sm:$0xff] %v658
  %663 = vst [vmem:[#allocation2 + $0x38] sm:$0xff] %v659
  %664 = vrot.lane.b32.xlu0 %v576, 15
  %v665 = vpop.permute.xlu0 %664
  %666 = vrot.lane.b32.xlu0 %v577, 15
  %v667 = vpop.permute.xlu0 %666
  %668 = vrot.lane.b32.xlu0 %v578, 15
  %v669 = vpop.permute.xlu0 %668
  %670 = vrot.lane.b32.xlu0 %v579, 15
  %v671 = vpop.permute.xlu0 %670
  %v672 = vsel %vm127, %v669, %v671
  %v673 = vsel %vm127, %v667, %v669
  %v674 = vsel %vm127, %v665, %v667
  %v675 = vsel %vm127, %v671, %v665
  %v676 = vld [vmem:[%s132] ss:$8 sm:$0xf]
  %v678 = vlaneseq
  %v679 = vshrl.u32 %v678, 7
  %v680 = vsub.s32 0, %v679
  %v681 = vrot.slane %v676, %v680
  %v682 = vlaneseq
  %v683 = vshrl.u32 %v682, 7
  %v684 = vsub.s32 1, %v683
  %v685 = vrot.slane %v676, %v684
  %v686 = vlaneseq
  %v687 = vshrl.u32 %v686, 7
  %v688 = vsub.s32 2, %v687
  %v689 = vrot.slane %v676, %v688
  %v690 = vlaneseq
  %v691 = vshrl.u32 %v690, 7
  %v692 = vsub.s32 3, %v691
  %v693 = vrot.slane %v676, %v692
  %v698 = vmul.f32 %v675, %v681
  %v699 = vmul.f32 %v674, %v685
  %v700 = vmul.f32 %v673, %v689
  %v701 = vmul.f32 %v672, %v693
  %702 = vst [vmem:[#allocation2 + $0x40] sm:$0xff] %v698
  %703 = vst [vmem:[#allocation2 + $0x48] sm:$0xff] %v699
  %704 = vst [vmem:[#allocation2 + $0x50] sm:$0xff] %v700
  %705 = vst [vmem:[#allocation2 + $0x58] sm:$0xff] %v701
  %706 = vrot.lane.b32.xlu0 %v576, 1
  %v707 = vpop.permute.xlu0 %706
  %708 = vrot.lane.b32.xlu0 %v577, 1
  %v709 = vpop.permute.xlu0 %708
  %710 = vrot.lane.b32.xlu0 %v578, 1
  %v711 = vpop.permute.xlu0 %710
  %712 = vrot.lane.b32.xlu0 %v579, 1
  %v713 = vpop.permute.xlu0 %712
  %v714 = vsel %vm171, %v711, %v713
  %v715 = vsel %vm171, %v709, %v711
  %v716 = vsel %vm171, %v707, %v709
  %v717 = vsel %vm171, %v713, %v707
  %v718 = vld [vmem:[%s176] ss:$8 sm:$0xf]
  %v720 = vlaneseq
  %v721 = vshrl.u32 %v720, 7
  %v722 = vsub.s32 0, %v721
  %v723 = vrot.slane %v718, %v722
  %v724 = vlaneseq
  %v725 = vshrl.u32 %v724, 7
  %v726 = vsub.s32 1, %v725
  %v727 = vrot.slane %v718, %v726
  %v728 = vlaneseq
  %v729 = vshrl.u32 %v728, 7
  %v730 = vsub.s32 2, %v729
  %v731 = vrot.slane %v718, %v730
  %v732 = vlaneseq
  %v733 = vshrl.u32 %v732, 7
  %v734 = vsub.s32 3, %v733
  %v735 = vrot.slane %v718, %v734
  %v740 = vmul.f32 %v717, %v723
  %v741 = vmul.f32 %v716, %v727
  %v742 = vmul.f32 %v715, %v731
  %v743 = vmul.f32 %v714, %v735
  %744 = vst [vmem:[#allocation2 + $0x60] sm:$0xff] %v740
  %745 = vst [vmem:[#allocation2 + $0x68] sm:$0xff] %v741
  %746 = vst [vmem:[#allocation2 + $0x70] sm:$0xff] %v742
  %747 = vst [vmem:[#allocation2 + $0x78] sm:$0xff] %v743
  %748 = vst [vmem:[#allocation2 + $0x80] sm:$0xff] %v576
  %749 = vst [vmem:[#allocation2 + $0x88] sm:$0xff] %v577
  %750 = vst [vmem:[#allocation2 + $0x90] sm:$0xff] %v578
  %751 = vst [vmem:[#allocation2 + $0x98] sm:$0xff] %v579
  %752 = vrot.lane.b32.xlu0 %v576, 127
  %v753 = vpop.permute.xlu0 %752
  %754 = vrot.lane.b32.xlu0 %v577, 127
  %v755 = vpop.permute.xlu0 %754
  %756 = vrot.lane.b32.xlu0 %v578, 127
  %v757 = vpop.permute.xlu0 %756
  %758 = vrot.lane.b32.xlu0 %v579, 127
  %v759 = vpop.permute.xlu0 %758
  %v760 = vsel %vm219, %v757, %v759
  %v761 = vsel %vm219, %v755, %v757
  %v762 = vsel %vm219, %v753, %v755
  %v763 = vsel %vm219, %v759, %v753
  %v764 = vld [vmem:[%s224] ss:$8 sm:$0xf]
  %v766 = vlaneseq
  %v767 = vshrl.u32 %v766, 7
  %v768 = vsub.s32 0, %v767
  %v769 = vrot.slane %v764, %v768
  %v770 = vlaneseq
  %v771 = vshrl.u32 %v770, 7
  %v772 = vsub.s32 1, %v771
  %v773 = vrot.slane %v764, %v772
  %v774 = vlaneseq
  %v775 = vshrl.u32 %v774, 7
  %v776 = vsub.s32 2, %v775
  %v777 = vrot.slane %v764, %v776
  %v778 = vlaneseq
  %v779 = vshrl.u32 %v778, 7
  %v780 = vsub.s32 3, %v779
  %v781 = vrot.slane %v764, %v780
  %v786 = vmul.f32 %v762, %v769
  %v787 = vmul.f32 %v761, %v773
  %v788 = vmul.f32 %v760, %v777
  %v789 = vmul.f32 %v763, %v781
  %790 = vst [vmem:[#allocation2 + $0xa0] sm:$0xff] %v786
  %791 = vst [vmem:[#allocation2 + $0xa8] sm:$0xff] %v787
  %792 = vst [vmem:[#allocation2 + $0xb0] sm:$0xff] %v788
  %793 = vst [vmem:[#allocation2 + $0xb8] sm:$0xff] %v789
  %794 = vrot.lane.b32.xlu0 %v576, 113
  %v795 = vpop.permute.xlu0 %794
  %796 = vrot.lane.b32.xlu0 %v577, 113
  %v797 = vpop.permute.xlu0 %796
  %798 = vrot.lane.b32.xlu0 %v578, 113
  %v799 = vpop.permute.xlu0 %798
  %800 = vrot.lane.b32.xlu0 %v579, 113
  %v801 = vpop.permute.xlu0 %800
  %v802 = vsel %vm263, %v799, %v801
  %v803 = vsel %vm263, %v797, %v799
  %v804 = vsel %vm263, %v795, %v797
  %v805 = vsel %vm263, %v801, %v795
  %v806 = vld [vmem:[%s268] ss:$8 sm:$0xf]
  %v808 = vlaneseq
  %v809 = vshrl.u32 %v808, 7
  %v810 = vsub.s32 0, %v809
  %v811 = vrot.slane %v806, %v810
  %v812 = vlaneseq
  %v813 = vshrl.u32 %v812, 7
  %v814 = vsub.s32 1, %v813
  %v815 = vrot.slane %v806, %v814
  %v816 = vlaneseq
  %v817 = vshrl.u32 %v816, 7
  %v818 = vsub.s32 2, %v817
  %v819 = vrot.slane %v806, %v818
  %v820 = vlaneseq
  %v821 = vshrl.u32 %v820, 7
  %v822 = vsub.s32 3, %v821
  %v823 = vrot.slane %v806, %v822
  %v828 = vmul.f32 %v804, %v811
  %v829 = vmul.f32 %v803, %v815
  %v830 = vmul.f32 %v802, %v819
  %v831 = vmul.f32 %v805, %v823
  %832 = vst [vmem:[#allocation2 + $0xc0] sm:$0xff] %v828
  %833 = vst [vmem:[#allocation2 + $0xc8] sm:$0xff] %v829
  %834 = vst [vmem:[#allocation2 + $0xd0] sm:$0xff] %v830
  %835 = vst [vmem:[#allocation2 + $0xd8] sm:$0xff] %v831
  %836 = vrot.lane.b32.xlu0 %v576, 112
  %v837 = vpop.permute.xlu0 %836
  %838 = vrot.lane.b32.xlu0 %v577, 112
  %v839 = vpop.permute.xlu0 %838
  %840 = vrot.lane.b32.xlu0 %v578, 112
  %v841 = vpop.permute.xlu0 %840
  %842 = vrot.lane.b32.xlu0 %v579, 112
  %v843 = vpop.permute.xlu0 %842
  %v844 = vsel %vm307, %v841, %v843
  %v845 = vsel %vm307, %v839, %v841
  %v846 = vsel %vm307, %v837, %v839
  %v847 = vsel %vm307, %v843, %v837
  %v848 = vld [vmem:[%s312] ss:$8 sm:$0xf]
  %v850 = vlaneseq
  %v851 = vshrl.u32 %v850, 7
  %v852 = vsub.s32 0, %v851
  %v853 = vrot.slane %v848, %v852
  %v854 = vlaneseq
  %v855 = vshrl.u32 %v854, 7
  %v856 = vsub.s32 1, %v855
  %v857 = vrot.slane %v848, %v856
  %v858 = vlaneseq
  %v859 = vshrl.u32 %v858, 7
  %v860 = vsub.s32 2, %v859
  %v861 = vrot.slane %v848, %v860
  %v862 = vlaneseq
  %v863 = vshrl.u32 %v862, 7
  %v864 = vsub.s32 3, %v863
  %v865 = vrot.slane %v848, %v864
  %v870 = vmul.f32 %v846, %v853
  %v871 = vmul.f32 %v845, %v857
  %v872 = vmul.f32 %v844, %v861
  %v873 = vmul.f32 %v847, %v865
  %874 = vst [vmem:[#allocation2 + $0xe0] sm:$0xff] %v870
  %875 = vst [vmem:[#allocation2 + $0xe8] sm:$0xff] %v871
  %876 = vst [vmem:[#allocation2 + $0xf0] sm:$0xff] %v872
  %877 = vst [vmem:[#allocation2 + $0xf8] sm:$0xff] %v873
  %878 = vrot.lane.b32.xlu0 %v576, 111
  %v879 = vpop.permute.xlu0 %878
  %880 = vrot.lane.b32.xlu0 %v577, 111
  %v881 = vpop.permute.xlu0 %880
  %882 = vrot.lane.b32.xlu0 %v578, 111
  %v883 = vpop.permute.xlu0 %882
  %884 = vrot.lane.b32.xlu0 %v579, 111
  %v885 = vpop.permute.xlu0 %884
  %v886 = vsel %vm351, %v883, %v885
  %v887 = vsel %vm351, %v881, %v883
  %v888 = vsel %vm351, %v879, %v881
  %v889 = vsel %vm351, %v885, %v879
  %v890 = vld [vmem:[%s356] ss:$8 sm:$0xf]
  %v892 = vlaneseq
  %v893 = vshrl.u32 %v892, 7
  %v894 = vsub.s32 0, %v893
  %v895 = vrot.slane %v890, %v894
  %v896 = vlaneseq
  %v897 = vshrl.u32 %v896, 7
  %v898 = vsub.s32 1, %v897
  %v899 = vrot.slane %v890, %v898
  %v900 = vlaneseq
  %v901 = vshrl.u32 %v900, 7
  %v902 = vsub.s32 2, %v901
  %v903 = vrot.slane %v890, %v902
  %v904 = vlaneseq
  %v905 = vshrl.u32 %v904, 7
  %v906 = vsub.s32 3, %v905
  %v907 = vrot.slane %v890, %v906
  %v912 = vmul.f32 %v888, %v895
  %v913 = vmul.f32 %v887, %v899
  %v914 = vmul.f32 %v886, %v903
  %v915 = vmul.f32 %v889, %v907
  %916 = vst [vmem:[#allocation2 + $0x100] sm:$0xff] %v912
  %917 = vst [vmem:[#allocation2 + $0x108] sm:$0xff] %v913
  %918 = vst [vmem:[#allocation2 + $0x110] sm:$0xff] %v914
  %919 = vst [vmem:[#allocation2 + $0x118] sm:$0xff] %v915
  %v920 = vld [vmem:[%s4] sm:$0xff]
  %v921 = vld [vmem:[%s4 + $0x8] sm:$0xff]
  %v922 = vld [vmem:[#allocation2] sm:$0xff]
  %v923 = vld [vmem:[#allocation2 + $0x8] sm:$0xff]
  %v924 = vld [vmem:[#allocation2 + $0x10] sm:$0xff]
  %v925 = vld [vmem:[#allocation2 + $0x18] sm:$0xff]
  %v926 = vld [vmem:[#allocation2 + $0x20] sm:$0xff]
  %v927 = vld [vmem:[#allocation2 + $0x28] sm:$0xff]
  %v928 = vld [vmem:[#allocation2 + $0x30] sm:$0xff]
  %v929 = vld [vmem:[#allocation2 + $0x38] sm:$0xff]
  %v930 = vld [vmem:[#allocation2 + $0x40] sm:$0xff]
  %v931 = vld [vmem:[#allocation2 + $0x48] sm:$0xff]
  %v932 = vld [vmem:[#allocation2 + $0x50] sm:$0xff]
  %v933 = vld [vmem:[#allocation2 + $0x58] sm:$0xff]
  %v934 = vld [vmem:[#allocation2 + $0x60] sm:$0xff]
  %v935 = vld [vmem:[#allocation2 + $0x68] sm:$0xff]
  %v936 = vld [vmem:[#allocation2 + $0x70] sm:$0xff]
  %v937 = vld [vmem:[#allocation2 + $0x78] sm:$0xff]
  %v938 = vld [vmem:[#allocation2 + $0x80] sm:$0xff]
  %v939 = vld [vmem:[#allocation2 + $0x88] sm:$0xff]
  %v940 = vld [vmem:[#allocation2 + $0x90] sm:$0xff]
  %v941 = vld [vmem:[#allocation2 + $0x98] sm:$0xff]
  %v942 = vld [vmem:[#allocation2 + $0xa0] sm:$0xff]
  %v943 = vld [vmem:[#allocation2 + $0xa8] sm:$0xff]
  %v944 = vld [vmem:[#allocation2 + $0xb0] sm:$0xff]
  %v945 = vld [vmem:[#allocation2 + $0xb8] sm:$0xff]
  %v946 = vld [vmem:[#allocation2 + $0xc0] sm:$0xff]
  %v947 = vld [vmem:[#allocation2 + $0xc8] sm:$0xff]
  %v948 = vld [vmem:[#allocation2 + $0xd0] sm:$0xff]
  %v949 = vld [vmem:[#allocation2 + $0xd8] sm:$0xff]
  %v950 = vld [vmem:[#allocation2 + $0xe0] sm:$0xff]
  %v951 = vld [vmem:[#allocation2 + $0xe8] sm:$0xff]
  %v952 = vld [vmem:[#allocation2 + $0xf0] sm:$0xff]
  %v953 = vld [vmem:[#allocation2 + $0xf8] sm:$0xff]
  %v954 = vld [vmem:[#allocation2 + $0x100] sm:$0xff]
  %v955 = vld [vmem:[#allocation2 + $0x108] sm:$0xff]
  %v956 = vld [vmem:[#allocation2 + $0x110] sm:$0xff]
  %v957 = vld [vmem:[#allocation2 + $0x118] sm:$0xff]
  %v958 = vld [vmem:[%s5] sm:$0xff]
  %v959 = vld [vmem:[%s5 + $0x8] sm:$0xff]
  %961 = vset.pattern.permute.xlu0 0
  %962 = vperm.xlu0 %961, %v958
  %v963 = vpop.permute.xlu0 %962
  %966 = vset.pattern.permute.xlu0 0
  %967 = vperm.xlu0 %966, %v959
  %v968 = vpop.permute.xlu0 %967
  %v971 = vsel %vm430, %v920, 0
  %v974 = vsel %vm430, %v921, 0
  %976 = vmatprep.subr.mxu0 %v923
  %977 = vmatpush1.msra.mxu0 %v922
  %978 = vmatprep.subr.mxu0 %v927
  %979 = vmatpush1.msra.mxu0 %v926
  %980 = vmatprep.subr.mxu0 %v931
  %981 = vmatpush1.msra.mxu0 %v930
  %982 = vmatprep.subr.mxu0 %v935
  %983 = vmatpush1.msra.mxu0 %v934
  %984 = vmatprep.subr.mxu0 %v939
  %985 = vmatpush1.msra.mxu0 %v938
  %986 = vmatprep.subr.mxu0 %v943
  %987 = vmatpush1.msra.mxu0 %v942
  %988 = vmatprep.subr.mxu0 %v947
  %989 = vmatpush1.msra.mxu0 %v946
  %990 = vmatprep.subr.mxu0 %v951
  %991 = vmatpush1.msra.mxu0 %v950
  %992 = vmatprep.subr.mxu0 %v955
  %993 = vmatpush1.msra.mxu0 %v954
  %994 = vmatprep.subr.mxu0 0.0
  %995 = vmatpush1.msra.mxu0 0.0
  %996 = vmatprep.subr.mxu0 0.0
  %997 = vmatpush1.msra.mxu0 0.0
  %998 = vmatprep.subr.mxu0 0.0
  %999 = vmatpush1.msra.mxu0 0.0
  %1000 = vmatprep.subr.mxu0 0.0
  %1001 = vmatpush1.msra.mxu0 0.0
  %1002 = vmatprep.subr.mxu0 0.0
  %1003 = vmatpush1.msra.mxu0 0.0
  %1004 = vmatprep.subr.mxu0 0.0
  %1005 = vmatpush1.msra.mxu0 0.0
  %1006 = vmatprep.subr.mxu0 0.0
  %1007 = vmatpush1.msra.mxu0 0.0
  %1008 = vmatprep.subr.mxu0 0.0
  %1009 = vmatpush1.msra.mxu0 0.0
  %1010 = vmatprep.subr.mxu0 0.0
  %1011 = vmatpush1.msra.mxu0 0.0
  %1012 = vmatprep.subr.mxu0 0.0
  %1013 = vmatpush1.msra.mxu0 0.0
  %1014 = vmatprep.subr.mxu0 0.0
  %1015 = vmatpush1.msra.mxu0 0.0
  %1016 = vmatprep.subr.mxu0 0.0
  %1017 = vmatpush1.msra.mxu0 0.0
  %1018 = vmatprep.subr.mxu0 0.0
  %1019 = vmatpush1.msra.mxu0 0.0
  %1020 = vmatprep.subr.mxu0 0.0
  %1021 = vmatpush1.msra.mxu0 0.0
  %1022 = vmatprep.subr.mxu0 0.0
  %1023 = vmatpush1.msra.mxu0 0.0
  %1024 = vmatprep.subr.mxu0 0.0
  %1025 = vmatpush1.msra.mxu0 0.0
  %1026 = vmatprep.subr.mxu0 0.0
  %1027 = vmatpush1.msra.mxu0 0.0
  %1028 = vmatprep.subr.mxu0 0.0
  %1029 = vmatpush1.msra.mxu0 0.0
  %1030 = vmatprep.subr.mxu0 0.0
  %1031 = vmatpush1.msra.mxu0 0.0
  %1032 = vmatprep.subr.mxu0 0.0
  %1033 = vmatpush1.msra.mxu0 0.0
  %1034 = vmatprep.subr.mxu0 0.0
  %1035 = vmatpush1.msra.mxu0 0.0
  %1036 = vmatprep.subr.mxu0 0.0
  %1037 = vmatpush1.msra.mxu0 0.0
  %1038 = vmatprep.subr.mxu0 0.0
  %1039 = vmatpush1.msra.mxu0 0.0
  %1040 = vmatprep.mubr.f32.mxu0 0.0
  %1041 = vmatmul.mubr.f32.gmra.mrb[0].mxu0 %v971
  %v1042 = vpop.f32.mrb[0].mxu0
  %v1043 = vadd.f32 %v963, %v1042
  %v1044 = vpop.f32.mrb[0].mxu0
  %v1045 = vadd.f32 %v963, %v1044
  %1046 = vmatprep.mubr.f32.mxu0 0.0
  %1047 = vmatmul.mubr.f32.gmra.mrb[0].mxu0 %v974
  %v1048 = vpop.f32.mrb[0].mxu0
  %v1049 = vadd.f32 %v968, %v1048
  %v1050 = vpop.f32.mrb[0].mxu0
  %v1051 = vadd.f32 %v968, %v1050
  %1052 = vdwg.mxu0
  %1053 = vmatprep.subr.mxu0 %v925
  %1054 = vmatpush1.msra.mxu0 %v924
  %1055 = vmatprep.subr.mxu0 %v929
  %1056 = vmatpush1.msra.mxu0 %v928
  %1057 = vmatprep.subr.mxu0 %v933
  %1058 = vmatpush1.msra.mxu0 %v932
  %1059 = vmatprep.subr.mxu0 %v937
  %1060 = vmatpush1.msra.mxu0 %v936
  %1061 = vmatprep.subr.mxu0 %v941
  %1062 = vmatpush1.msra.mxu0 %v940
  %1063 = vmatprep.subr.mxu0 %v945
  %1064 = vmatpush1.msra.mxu0 %v944
  %1065 = vmatprep.subr.mxu0 %v949
  %1066 = vmatpush1.msra.mxu0 %v948
  %1067 = vmatprep.subr.mxu0 %v953
  %1068 = vmatpush1.msra.mxu0 %v952
  %1069 = vmatprep.subr.mxu0 %v957
  %1070 = vmatpush1.msra.mxu0 %v956
  %1071 = vmatprep.subr.mxu0 0.0
  %1072 = vmatpush1.msra.mxu0 0.0
  %1073 = vmatprep.subr.mxu0 0.0
  %1074 = vmatpush1.msra.mxu0 0.0
  %1075 = vmatprep.subr.mxu0 0.0
  %1076 = vmatpush1.msra.mxu0 0.0
  %1077 = vmatprep.subr.mxu0 0.0
  %1078 = vmatpush1.msra.mxu0 0.0
  %1079 = vmatprep.subr.mxu0 0.0
  %1080 = vmatpush1.msra.mxu0 0.0
  %1081 = vmatprep.subr.mxu0 0.0
  %1082 = vmatpush1.msra.mxu0 0.0
  %1083 = vmatprep.subr.mxu0 0.0
  %1084 = vmatpush1.msra.mxu0 0.0
  %1085 = vmatprep.subr.mxu0 0.0
  %1086 = vmatpush1.msra.mxu0 0.0
  %1087 = vmatprep.subr.mxu0 0.0
  %1088 = vmatpush1.msra.mxu0 0.0
  %1089 = vmatprep.subr.mxu0 0.0
  %1090 = vmatpush1.msra.mxu0 0.0
  %1091 = vmatprep.subr.mxu0 0.0
  %1092 = vmatpush1.msra.mxu0 0.0
  %1093 = vmatprep.subr.mxu0 0.0
  %1094 = vmatpush1.msra.mxu0 0.0
  %1095 = vmatprep.subr.mxu0 0.0
  %1096 = vmatpush1.msra.mxu0 0.0
  %1097 = vmatprep.subr.mxu0 0.0
  %1098 = vmatpush1.msra.mxu0 0.0
  %1099 = vmatprep.subr.mxu0 0.0
  %1100 = vmatpush1.msra.mxu0 0.0
  %1101 = vmatprep.subr.mxu0 0.0
  %1102 = vmatpush1.msra.mxu0 0.0
  %1103 = vmatprep.subr.mxu0 0.0
  %1104 = vmatpush1.msra.mxu0 0.0
  %1105 = vmatprep.subr.mxu0 0.0
  %1106 = vmatpush1.msra.mxu0 0.0
  %1107 = vmatprep.subr.mxu0 0.0
  %1108 = vmatpush1.msra.mxu0 0.0
  %1109 = vmatprep.subr.mxu0 0.0
  %1110 = vmatpush1.msra.mxu0 0.0
  %1111 = vmatprep.subr.mxu0 0.0
  %1112 = vmatpush1.msra.mxu0 0.0
  %1113 = vmatprep.subr.mxu0 0.0
  %1114 = vmatpush1.msra.mxu0 0.0
  %1115 = vmatprep.subr.mxu0 0.0
  %1116 = vmatpush1.msra.mxu0 0.0
  %1117 = vmatprep.mubr.f32.mxu0 0.0
  %1118 = vmatmul.mubr.f32.gmra.mrb[0].mxu0 %v971
  %v1119 = vpop.f32.mrb[0].mxu0
  %v1120 = vadd.f32 %v963, %v1119
  %v1121 = vpop.f32.mrb[0].mxu0
  %v1122 = vadd.f32 %v963, %v1121
  %1123 = vmatprep.mubr.f32.mxu0 0.0
  %1124 = vmatmul.mubr.f32.gmra.mrb[0].mxu0 %v974
  %v1125 = vpop.f32.mrb[0].mxu0
  %v1126 = vadd.f32 %v968, %v1125
  %v1127 = vpop.f32.mrb[0].mxu0
  %v1128 = vadd.f32 %v968, %v1127
  %1129 = vdwg.mxu0
  %v1130 = vmax.f32 %v1043, 0.0
  %v1131 = vmax.f32 %v1045, 0.0
  %v1132 = vmax.f32 %v1120, 0.0
  %v1133 = vmax.f32 %v1122, 0.0
  %v1134 = vmax.f32 %v1049, 0.0
  %v1135 = vmax.f32 %v1051, 0.0
  %v1136 = vmax.f32 %v1126, 0.0
  %v1137 = vmax.f32 %v1128, 0.0
  %1138 = vrot.lane.b32.xlu0 %v1130, 127
  %v1139 = vpop.permute.xlu0 %1138
  %1140 = vrot.lane.b32.xlu0 %v1134, 127
  %v1141 = vpop.permute.xlu0 %1140
  %1142 = vrot.lane.b32.xlu0 %v1131, 127
  %v1143 = vpop.permute.xlu0 %1142
  %1144 = vrot.lane.b32.xlu0 %v1135, 127
  %v1145 = vpop.permute.xlu0 %1144
  %1146 = vrot.lane.b32.xlu0 %v1132, 127
  %v1147 = vpop.permute.xlu0 %1146
  %1148 = vrot.lane.b32.xlu0 %v1136, 127
  %v1149 = vpop.permute.xlu0 %1148
  %1150 = vrot.lane.b32.xlu0 %v1133, 127
  %v1151 = vpop.permute.xlu0 %1150
  %1152 = vrot.lane.b32.xlu0 %v1137, 127
  %v1153 = vpop.permute.xlu0 %1152
  %v1154 = vsel %vm219, %v1147, %v1151
  %v1155 = vsel %vm219, %v1149, %v1153
  %v1156 = vsel %vm219, %v1143, %v1147
  %v1157 = vsel %vm219, %v1145, %v1149
  %v1158 = vsel %vm219, %v1139, %v1143
  %v1159 = vsel %vm219, %v1141, %v1145
  %v1160 = vsel %vm219, %v1151, %v1139
  %v1161 = vsel %vm219, %v1153, %v1141
  %v1162 = vmax.f32 %v1130, %v1158
  %v1163 = vmax.f32 %v1131, %v1156
  %v1164 = vmax.f32 %v1132, %v1154
  %v1165 = vmax.f32 %v1133, %v1160
  %v1166 = vmax.f32 %v1134, %v1159
  %v1167 = vmax.f32 %v1135, %v1157
  %v1168 = vmax.f32 %v1136, %v1155
  %v1169 = vmax.f32 %v1137, %v1161
  %1170 = vrot.lane.b32.xlu0 %v1162, 112
  %v1171 = vpop.permute.xlu0 %1170
  %1172 = vrot.lane.b32.xlu0 %v1166, 112
  %v1173 = vpop.permute.xlu0 %1172
  %1174 = vrot.lane.b32.xlu0 %v1163, 112
  %v1175 = vpop.permute.xlu0 %1174
  %1176 = vrot.lane.b32.xlu0 %v1167, 112
  %v1177 = vpop.permute.xlu0 %1176
  %1178 = vrot.lane.b32.xlu0 %v1164, 112
  %v1179 = vpop.permute.xlu0 %1178
  %1180 = vrot.lane.b32.xlu0 %v1168, 112
  %v1181 = vpop.permute.xlu0 %1180
  %1182 = vrot.lane.b32.xlu0 %v1165, 112
  %v1183 = vpop.permute.xlu0 %1182
  %1184 = vrot.lane.b32.xlu0 %v1169, 112
  %v1185 = vpop.permute.xlu0 %1184
  %v1186 = vsel %vm307, %v1179, %v1183
  %v1187 = vsel %vm307, %v1181, %v1185
  %v1188 = vsel %vm307, %v1175, %v1179
  %v1189 = vsel %vm307, %v1177, %v1181
  %v1190 = vsel %vm307, %v1171, %v1175
  %v1191 = vsel %vm307, %v1173, %v1177
  %v1192 = vsel %vm307, %v1183, %v1171
  %v1193 = vsel %vm307, %v1185, %v1173
  %v1194 = vmax.f32 %v1162, %v1190
  %v1195 = vmax.f32 %v1163, %v1188
  %v1196 = vmax.f32 %v1164, %v1186
  %v1197 = vmax.f32 %v1165, %v1192
  %v1198 = vmax.f32 %v1166, %v1191
  %v1199 = vmax.f32 %v1167, %v1189
  %v1200 = vmax.f32 %v1168, %v1187
  %v1201 = vmax.f32 %v1169, %v1193
  %v1202 = vld [vmem:[%s6] sm:$0xff]
  %v1203 = vld [vmem:[%s6 + $0x8] sm:$0xff]
  %v1204 = vld [vmem:[%s6 + $0x10] sm:$0xff]
  %v1205 = vld [vmem:[%s6 + $0x18] sm:$0xff]
  %v1206 = vld [vmem:[%s6 + $0x20] sm:$0xff]
  %v1207 = vld [vmem:[%s6 + $0x28] sm:$0xff]
  %v1208 = vld [vmem:[%s6 + $0x30] sm:$0xff]
  %v1209 = vld [vmem:[%s6 + $0x38] sm:$0xff]
  %v1210 = vld [vmem:[%s6 + $0x40] sm:$0xff]
  %v1211 = vld [vmem:[%s6 + $0x48] sm:$0xff]
  %v1212 = vld [vmem:[%s6 + $0x50] sm:$0xff]
  %v1213 = vld [vmem:[%s6 + $0x58] sm:$0xff]
  %v1214 = vld [vmem:[%s6 + $0x60] sm:$0xff]
  %v1215 = vld [vmem:[%s6 + $0x68] sm:$0xff]
  %v1216 = vld [vmem:[%s6 + $0x70] sm:$0xff]
  %v1217 = vld [vmem:[%s6 + $0x78] sm:$0xff]
  %v1218 = vld [vmem:[%s6 + $0x80] sm:$0xff]
  %v1219 = vld [vmem:[%s6 + $0x88] sm:$0xff]
  %v1220 = vld [vmem:[%s6 + $0x90] sm:$0xff]
  %v1221 = vld [vmem:[%s6 + $0x98] sm:$0xff]
  %v1222 = vld [vmem:[%s6 + $0xa0] sm:$0xff]
  %v1223 = vld [vmem:[%s6 + $0xa8] sm:$0xff]
  %v1224 = vld [vmem:[%s6 + $0xb0] sm:$0xff]
  %v1225 = vld [vmem:[%s6 + $0xb8] sm:$0xff]
  %v1226 = vld [vmem:[%s6 + $0xc0] sm:$0xff]
  %v1227 = vld [vmem:[%s6 + $0xc8] sm:$0xff]
  %v1228 = vld [vmem:[%s6 + $0xd0] sm:$0xff]
  %v1229 = vld [vmem:[%s6 + $0xd8] sm:$0xff]
  %v1230 = vld [vmem:[%s6 + $0xe0] sm:$0xff]
  %v1231 = vld [vmem:[%s6 + $0xe8] sm:$0xff]
  %v1232 = vld [vmem:[%s6 + $0xf0] sm:$0xff]
  %v1233 = vld [vmem:[%s6 + $0xf8] sm:$0xff]
  %v1234 = vld [vmem:[%s6 + $0x100] sm:$0xff]
  %v1235 = vld [vmem:[%s6 + $0x108] sm:$0xff]
  %v1236 = vld [vmem:[%s6 + $0x110] sm:$0xff]
  %v1237 = vld [vmem:[%s6 + $0x118] sm:$0xff]
  %v1238 = vld [vmem:[%s6 + $0x120] sm:$0xff]
  %v1239 = vld [vmem:[%s6 + $0x128] sm:$0xff]
  %v1240 = vld [vmem:[%s6 + $0x130] sm:$0xff]
  %v1241 = vld [vmem:[%s6 + $0x138] sm:$0xff]
  %v1242 = vld [vmem:[%s6 + $0x140] sm:$0xff]
  %v1243 = vld [vmem:[%s6 + $0x148] sm:$0xff]
  %v1244 = vld [vmem:[%s6 + $0x150] sm:$0xff]
  %v1245 = vld [vmem:[%s6 + $0x158] sm:$0xff]
  %v1246 = vld [vmem:[%s6 + $0x160] sm:$0xff]
  %v1247 = vld [vmem:[%s6 + $0x168] sm:$0xff]
  %v1248 = vld [vmem:[%s6 + $0x170] sm:$0xff]
  %v1249 = vld [vmem:[%s6 + $0x178] sm:$0xff]
  %v1250 = vld [vmem:[%s6 + $0x180] sm:$0xff]
  %v1251 = vld [vmem:[%s6 + $0x188] sm:$0xff]
  %v1252 = vld [vmem:[%s6 + $0x190] sm:$0xff]
  %v1253 = vld [vmem:[%s6 + $0x198] sm:$0xff]
  %v1254 = vld [vmem:[%s6 + $0x1a0] sm:$0xff]
  %v1255 = vld [vmem:[%s6 + $0x1a8] sm:$0xff]
  %v1256 = vld [vmem:[%s6 + $0x1b0] sm:$0xff]
  %v1257 = vld [vmem:[%s6 + $0x1b8] sm:$0xff]
  %v1258 = vld [vmem:[%s6 + $0x1c0] sm:$0xff]
  %v1259 = vld [vmem:[%s6 + $0x1c8] sm:$0xff]
  %v1260 = vld [vmem:[%s6 + $0x1d0] sm:$0xff]
  %v1261 = vld [vmem:[%s6 + $0x1d8] sm:$0xff]
  %v1262 = vld [vmem:[%s6 + $0x1e0] sm:$0xff]
  %v1263 = vld [vmem:[%s6 + $0x1e8] sm:$0xff]
  %v1264 = vld [vmem:[%s6 + $0x1f0] sm:$0xff]
  %v1265 = vld [vmem:[%s6 + $0x1f8] sm:$0xff]
  %1266 = vmatprep.subr.mxu0 0.0
  %1267 = vmatpush1.msra.mxu0 %v1202
  %1268 = vmatprep.subr.mxu0 0.0
  %1269 = vmatpush1.msra.mxu0 %v1203
  %1270 = vmatprep.subr.mxu0 0.0
  %1271 = vmatpush1.msra.mxu0 %v1204
  %1272 = vmatprep.subr.mxu0 0.0
  %1273 = vmatpush1.msra.mxu0 %v1205
  %1274 = vmatprep.subr.mxu0 0.0
  %1275 = vmatpush1.msra.mxu0 %v1206
  %1276 = vmatprep.subr.mxu0 0.0
  %1277 = vmatpush1.msra.mxu0 %v1207
  %1278 = vmatprep.subr.mxu0 0.0
  %1279 = vmatpush1.msra.mxu0 %v1208
  %1280 = vmatprep.subr.mxu0 0.0
  %1281 = vmatpush1.msra.mxu0 %v1209
  %1282 = vmatprep.subr.mxu0 0.0
  %1283 = vmatpush1.msra.mxu0 %v1210
  %1284 = vmatprep.subr.mxu0 0.0
  %1285 = vmatpush1.msra.mxu0 %v1211
  %1286 = vmatprep.subr.mxu0 0.0
  %1287 = vmatpush1.msra.mxu0 %v1212
  %1288 = vmatprep.subr.mxu0 0.0
  %1289 = vmatpush1.msra.mxu0 %v1213
  %1290 = vmatprep.subr.mxu0 0.0
  %1291 = vmatpush1.msra.mxu0 %v1214
  %1292 = vmatprep.subr.mxu0 0.0
  %1293 = vmatpush1.msra.mxu0 %v1215
  %1294 = vmatprep.subr.mxu0 0.0
  %1295 = vmatpush1.msra.mxu0 %v1216
  %1296 = vmatprep.subr.mxu0 0.0
  %1297 = vmatpush1.msra.mxu0 %v1217
  %1298 = vmatprep.subr.mxu0 0.0
  %1299 = vmatpush1.msra.mxu0 %v1218
  %1300 = vmatprep.subr.mxu0 0.0
  %1301 = vmatpush1.msra.mxu0 %v1219
  %1302 = vmatprep.subr.mxu0 0.0
  %1303 = vmatpush1.msra.mxu0 %v1220
  %1304 = vmatprep.subr.mxu0 0.0
  %1305 = vmatpush1.msra.mxu0 %v1221
  %1306 = vmatprep.subr.mxu0 0.0
  %1307 = vmatpush1.msra.mxu0 %v1222
  %1308 = vmatprep.subr.mxu0 0.0
  %1309 = vmatpush1.msra.mxu0 %v1223
  %1310 = vmatprep.subr.mxu0 0.0
  %1311 = vmatpush1.msra.mxu0 %v1224
  %1312 = vmatprep.subr.mxu0 0.0
  %1313 = vmatpush1.msra.mxu0 %v1225
  %1314 = vmatprep.subr.mxu0 0.0
  %1315 = vmatpush1.msra.mxu0 %v1226
  %1316 = vmatprep.subr.mxu0 0.0
  %1317 = vmatpush1.msra.mxu0 %v1227
  %1318 = vmatprep.subr.mxu0 0.0
  %1319 = vmatpush1.msra.mxu0 %v1228
  %1320 = vmatprep.subr.mxu0 0.0
  %1321 = vmatpush1.msra.mxu0 %v1229
  %1322 = vmatprep.subr.mxu0 0.0
  %1323 = vmatpush1.msra.mxu0 %v1230
  %1324 = vmatprep.subr.mxu0 0.0
  %1325 = vmatpush1.msra.mxu0 %v1231
  %1326 = vmatprep.subr.mxu0 0.0
  %1327 = vmatpush1.msra.mxu0 %v1232
  %1328 = vmatprep.subr.mxu0 0.0
  %1329 = vmatpush1.msra.mxu0 %v1233
  %1330 = vmatprep.mubr.f32.mxu0 %v1195
  %1331 = vmatmul.mubr.f32.gmra.mrb[0].mxu0 %v1194
  %v1332 = vpop.f32.mrb[0].mxu0
  %v1333 = vadd.f32 0.0, %v1332
  %v1334 = vpop.f32.mrb[0].mxu0
  %1335 = vmatprep.mubr.f32.mxu0 %v1199
  %1336 = vmatmul.mubr.f32.gmra.mrb[0].mxu0 %v1198
  %v1337 = vpop.f32.mrb[0].mxu0
  %v1338 = vadd.f32 0.0, %v1337
  %v1339 = vpop.f32.mrb[0].mxu0
  %1340 = vdwg.mxu0
  %1341 = vmatprep.subr.mxu0 0.0
  %1342 = vmatpush1.msra.mxu0 %v1234
  %1343 = vmatprep.subr.mxu0 0.0
  %1344 = vmatpush1.msra.mxu0 %v1235
  %1345 = vmatprep.subr.mxu0 0.0
  %1346 = vmatpush1.msra.mxu0 %v1236
  %1347 = vmatprep.subr.mxu0 0.0
  %1348 = vmatpush1.msra.mxu0 %v1237
  %1349 = vmatprep.subr.mxu0 0.0
  %1350 = vmatpush1.msra.mxu0 %v1238
  %1351 = vmatprep.subr.mxu0 0.0
  %1352 = vmatpush1.msra.mxu0 %v1239
  %1353 = vmatprep.subr.mxu0 0.0
  %1354 = vmatpush1.msra.mxu0 %v1240
  %1355 = vmatprep.subr.mxu0 0.0
  %1356 = vmatpush1.msra.mxu0 %v1241
  %1357 = vmatprep.subr.mxu0 0.0
  %1358 = vmatpush1.msra.mxu0 %v1242
  %1359 = vmatprep.subr.mxu0 0.0
  %1360 = vmatpush1.msra.mxu0 %v1243
  %1361 = vmatprep.subr.mxu0 0.0
  %1362 = vmatpush1.msra.mxu0 %v1244
  %1363 = vmatprep.subr.mxu0 0.0
  %1364 = vmatpush1.msra.mxu0 %v1245
  %1365 = vmatprep.subr.mxu0 0.0
  %1366 = vmatpush1.msra.mxu0 %v1246
  %1367 = vmatprep.subr.mxu0 0.0
  %1368 = vmatpush1.msra.mxu0 %v1247
  %1369 = vmatprep.subr.mxu0 0.0
  %1370 = vmatpush1.msra.mxu0 %v1248
  %1371 = vmatprep.subr.mxu0 0.0
  %1372 = vmatpush1.msra.mxu0 %v1249
  %1373 = vmatprep.subr.mxu0 0.0
  %1374 = vmatpush1.msra.mxu0 %v1250
  %1375 = vmatprep.subr.mxu0 0.0
  %1376 = vmatpush1.msra.mxu0 %v1251
  %1377 = vmatprep.subr.mxu0 0.0
  %1378 = vmatpush1.msra.mxu0 %v1252
  %1379 = vmatprep.subr.mxu0 0.0
  %1380 = vmatpush1.msra.mxu0 %v1253
  %1381 = vmatprep.subr.mxu0 0.0
  %1382 = vmatpush1.msra.mxu0 %v1254
  %1383 = vmatprep.subr.mxu0 0.0
  %1384 = vmatpush1.msra.mxu0 %v1255
  %1385 = vmatprep.subr.mxu0 0.0
  %1386 = vmatpush1.msra.mxu0 %v1256
  %1387 = vmatprep.subr.mxu0 0.0
  %1388 = vmatpush1.msra.mxu0 %v1257
  %1389 = vmatprep.subr.mxu0 0.0
  %1390 = vmatpush1.msra.mxu0 %v1258
  %1391 = vmatprep.subr.mxu0 0.0
  %1392 = vmatpush1.msra.mxu0 %v1259
  %1393 = vmatprep.subr.mxu0 0.0
  %1394 = vmatpush1.msra.mxu0 %v1260
  %1395 = vmatprep.subr.mxu0 0.0
  %1396 = vmatpush1.msra.mxu0 %v1261
  %1397 = vmatprep.subr.mxu0 0.0
  %1398 = vmatpush1.msra.mxu0 %v1262
  %1399 = vmatprep.subr.mxu0 0.0
  %1400 = vmatpush1.msra.mxu0 %v1263
  %1401 = vmatprep.subr.mxu0 0.0
  %1402 = vmatpush1.msra.mxu0 %v1264
  %1403 = vmatprep.subr.mxu0 0.0
  %1404 = vmatpush1.msra.mxu0 %v1265
  %1405 = vmatprep.mubr.f32.mxu0 %v1197
  %1406 = vmatmul.mubr.f32.gmra.mrb[0].mxu0 %v1196
  %v1407 = vpop.f32.mrb[0].mxu0
  %v1408 = vadd.f32 %v1333, %v1407
  %v1409 = vpop.f32.mrb[0].mxu0
  %1410 = vmatprep.mubr.f32.mxu0 %v1201
  %1411 = vmatmul.mubr.f32.gmra.mrb[0].mxu0 %v1200
  %v1412 = vpop.f32.mrb[0].mxu0
  %v1413 = vadd.f32 %v1338, %v1412
  %v1414 = vpop.f32.mrb[0].mxu0
  %1415 = vdwg.mxu0
  %1416 = vst [vmem:[%s7] sm:$0xff] %v1408
  %1417 = vst [vmem:[%s7 + $0x8] sm:$0xff] %v1413
  // Predicated region
  $region30: #{_deep_cnn_forward.1} parent=0 // pred_check
    _
  $region31: #{_deep_cnn_forward.1} parent=0 // pred_check_branch
    %1419 = sbr.rel (0) target = $region33
  $region32: #{_deep_cnn_forward.1} parent=0 // pred_region
    _
  $region33: #{_deep_cnn_forward.1} parent=0 // pred_fallthru
    _
  // Predicated region
  $region34: #{_deep_cnn_forward.1} parent=0 // pred_check
    _
  $region35: #{_deep_cnn_forward.1} parent=0 // pred_check_branch
    %1421 = sbr.rel (0) target = $region37
  $region36: #{_deep_cnn_forward.1} parent=0 // pred_region
    _
  $region37: #{_deep_cnn_forward.1} parent=0 // pred_fallthru
    _

</llo_original>
